<compile_context>
chip_gen: v6e
topology: v6e:2x2x1
jax: 0.10.0
libtpu: 0.0.40
codegen_flags: <defaults>
</compile_context>

<pallas_src>
import functools

import jax
import jax.numpy as jnp
from jax import lax
from jax.experimental import pallas as pl
from jax.experimental.pallas import tpu as pltpu


def _round_up(x, m):
    return ((x + m - 1) // m) * m


def jet_classifier_kernel(x_ref, w1_ref, b1_ref, w2_ref, b2_ref, w3_ref, b3_ref,
                          out_ref, acc_ref, *, n_part, n_feat):
    """Fused deep-set transform + clf readout for one tile of jets.

    x_ref   : (TILE_J, P*F) f32   jets on sublane-major axis, natural layout
    w1_ref  : (H_pad, F)    f32   particle projection (transposed)
    b1_ref  : (H_pad, 1)    f32
    w2_ref  : (H_pad, H_pad) f32  readout hidden layer (transposed)
    b2_ref  : (H_pad, 1)    f32
    w3_ref  : (H_pad, 1)    f32   readout output weights (column)
    b3_ref  : (1, 1)        f32   scalar in SMEM
    out_ref : (1, TILE_J)   f32   sigmoid probabilities (lane-dense row)
    acc_ref : (H_pad, TILE_J) f32 scratch accumulator (bounded intermediate)
    """
    w1 = w1_ref[...]                      # (H_pad, F)
    b1 = b1_ref[...]                      # (H_pad, 1)

    # ---- transform: per-particle Linear + ReLU, accumulated (sum) ----------
    # 'hf,jf->hj' : contract F of both operands; jets end up on lanes, so no
    # wrapper-side transpose of x is ever needed.
    dims = (((1,), (1,)), ((), ()))
    for p in range(n_part):                                    # static unroll
        xp = x_ref[:, p * n_feat:(p + 1) * n_feat]             # (TILE_J, F)
        h = lax.dot_general(w1, xp, dims,
                            preferred_element_type=jnp.float32)  # (H_pad, TILE_J)
        h = jnp.maximum(h + b1, 0.0)
        if p == 0:
            acc_ref[...] = h
        else:
            acc_ref[...] += h

    emb = acc_ref[...] * (1.0 / n_part)    # exact f32 mean pool, (H_pad, TILE_J)

    # ---- predictor: hidden layer + ReLU ------------------------------------
    h2 = jnp.dot(w2_ref[...], emb, preferred_element_type=jnp.float32)
    h2 = jnp.maximum(h2 + b2_ref[...], 0.0)                    # (H_pad, TILE_J)

    # ---- output projection on VPU + XLU (a 1xH MXU matmul would be wasted) -
    logit = jnp.sum(h2 * w3_ref[...], axis=0, keepdims=True) + b3_ref[0, 0]
    out_ref[...] = jax.nn.sigmoid(logit)                       # (1, TILE_J)


@functools.partial(jax.jit, static_argnames=("tile_j",))
def jet_classifier_forward(x, params, *, tile_j=256):
    """x: (N, P, F) float32 -> (N,) probabilities.

    tile_j=256 fills the 256-wide MXU on v6e/v7x; use tile_j=128 on v5e.
    """
    n_jets, n_part, n_feat = x.shape
    hidden = params["w1"].shape[1]
    h_pad = _round_up(hidden, 128)

    # Clamp the tile for small batches so we don't burn a full 256-wide tile of
    # padding (and so small-N grids still produce >=1 sensible step).
    tile = min(tile_j, _round_up(n_jets, 128))
    n_pad = _round_up(n_jets, tile)
    n_tiles = n_pad // tile

    # Natural layout: pad jet axis, flatten (P, F) -> P*F.  No HBM transpose.
    x2 = jnp.pad(x, ((0, n_pad - n_jets), (0, 0), (0, 0)))
    x2 = x2.reshape(n_pad, n_part * n_feat).astype(jnp.float32)

    # Weights transposed, hidden zero-padded to a 128 multiple (padding exact:
    # padded rows stay 0 through ReLU / matmuls / final sum).
    w1_t = jnp.pad(params["w1"], ((0, 0), (0, h_pad - hidden))).T.astype(jnp.float32)
    b1_c = jnp.pad(params["b1"], (0, h_pad - hidden)).reshape(h_pad, 1).astype(jnp.float32)
    w2_t = jnp.pad(params["w2"], ((0, h_pad - hidden), (0, h_pad - hidden))).T.astype(jnp.float32)
    b2_c = jnp.pad(params["b2"], (0, h_pad - hidden)).reshape(h_pad, 1).astype(jnp.float32)
    w3_c = jnp.pad(params["w3"][:, 0], (0, h_pad - hidden)).reshape(h_pad, 1).astype(jnp.float32)
    b3_c = params["b3"].reshape(1, 1).astype(jnp.float32)

    def resident(shape):  # full-array weight spec, same block every grid step
        return pl.BlockSpec(shape, lambda i: (0, 0))

    kernel = functools.partial(jet_classifier_kernel,
                               n_part=n_part, n_feat=n_feat)

    out = pl.pallas_call(
        kernel,
        out_shape=jax.ShapeDtypeStruct((n_tiles, tile), jnp.float32),
        grid=(n_tiles,),
        in_specs=[
            pl.BlockSpec((tile, n_part * n_feat), lambda i: (i, 0)),  # x tile
            resident((h_pad, n_feat)),                                # w1^T
            resident((h_pad, 1)),                                     # b1
            resident((h_pad, h_pad)),                                 # w2^T
            resident((h_pad, 1)),                                     # b2
            resident((h_pad, 1)),                                     # w3 column
            pl.BlockSpec(memory_space=pltpu.MemorySpace.SMEM),        # b3 scalar
        ],
        out_specs=pl.BlockSpec((1, tile), lambda i: (i, 0)),
        scratch_shapes=[pltpu.VMEM((h_pad, tile), jnp.float32)],
        compiler_params=pltpu.CompilerParams(
            dimension_semantics=("parallel",),
            vmem_limit_bytes=32 * 1024 * 1024,
        ),
    )(x2, w1_t, b1_c, w2_t, b2_c, w3_c, b3_c)

    return out.reshape(-1)[:n_jets]


def init_params(key, n_feat, hidden):
    k1, k2, k3, k4, k5, k6 = jax.random.split(key, 6)
    s1 = 1.0 / jnp.sqrt(n_feat)
    s2 = 1.0 / jnp.sqrt(hidden)
    return {
        "w1": jax.random.normal(k1, (n_feat, hidden), jnp.float32) * s1,
        "b1": jax.random.normal(k4, (hidden,), jnp.float32) * 0.1,
        "w2": jax.random.normal(k2, (hidden, hidden), jnp.float32) * s2,
        "b2": jax.random.normal(k5, (hidden,), jnp.float32) * 0.1,
        "w3": jax.random.normal(k3, (hidden, 1), jnp.float32) * s2,
        "b3": jax.random.normal(k6, (), jnp.float32) * 0.1,
    }


def reference_forward(x, params):
    """Pure-JAX f32 reference of the true deep-set + clf-readout forward."""
    h1 = jnp.einsum("npf,fh->nph", x, params["w1"]) + params["b1"][None, None, :]
    h1 = jnp.maximum(h1, 0.0)
    emb = h1.mean(axis=1)
    h2 = jnp.maximum(emb @ params["w2"] + params["b2"][None, :], 0.0)
    logit = (h2 @ params["w3"])[:, 0] + params["b3"]
    return jax.nn.sigmoid(logit)


if __name__ == "__main__":
    key = jax.random.PRNGKey(0)
    k_x, k_p = jax.random.split(key)

    N, P, F, H = 2, 8, 4, 32          # N jets, P particles/jet, F features, hidden
    x = jax.random.normal(k_x, (N, P, F), jnp.float32)
    params = init_params(k_p, F, H)

    probs = jet_classifier_forward(x, params)
    jax.block_until_ready(probs)

    ref = reference_forward(x, params)
    assert probs.shape == (N,)
    assert jnp.allclose(probs, ref, atol=2e-3, rtol=2e-3), (probs, ref)

    print("KERNEL_OK")
</pallas_src>

<mosaic_0001>
module attributes {stable_mosaic.version = 11 : i64} {
  func.func @jet_classifier_kernel(%arg0: i32, %arg1: memref<128x32xf32, #tpu.memory_space<vmem>>, %arg2: memref<128x4xf32, #tpu.memory_space<vmem>>, %arg3: memref<128x1xf32, #tpu.memory_space<vmem>>, %arg4: memref<128x128xf32, #tpu.memory_space<vmem>>, %arg5: memref<128x1xf32, #tpu.memory_space<vmem>>, %arg6: memref<128x1xf32, #tpu.memory_space<vmem>>, %arg7: memref<1x1xf32, #tpu.memory_space<smem>>, %arg8: memref<1x128xf32, #tpu.memory_space<vmem>>, %arg9: memref<128x128xf32, #tpu.memory_space<vmem>>) attributes {dimension_semantics = [#tpu.dimension_semantics<parallel>], iteration_bounds = array<i64: 1>, scalar_prefetch = 0 : i64, scratch_operands = 1 : i64, tpu.core_type = #tpu.core_type<tc>, window_params = [{transform_indices = @transform_0, window_bounds = array<i64: 128, 32>}, {pipeline_mode = #tpu.pipeline_mode<synchronous>, transform_indices = @transform_1, window_bounds = array<i64: 128, 4>}, {pipeline_mode = #tpu.pipeline_mode<synchronous>, transform_indices = @transform_2, window_bounds = array<i64: 128, 1>}, {pipeline_mode = #tpu.pipeline_mode<synchronous>, transform_indices = @transform_3, window_bounds = array<i64: 128, 128>}, {pipeline_mode = #tpu.pipeline_mode<synchronous>, transform_indices = @transform_4, window_bounds = array<i64: 128, 1>}, {pipeline_mode = #tpu.pipeline_mode<synchronous>, transform_indices = @transform_5, window_bounds = array<i64: 128, 1>}, {transform_indices = @transform_6, window_bounds = array<i64: 1, 1>}, {transform_indices = @transform_7, window_bounds = array<i64: 1, 128>}]} {
    %c0 = arith.constant 0 : index
    %c0_0 = arith.constant 0 : index
    %0 = vector.load %arg2[%c0, %c0_0] : memref<128x4xf32, #tpu.memory_space<vmem>>, vector<128x4xf32>
    %c0_1 = arith.constant 0 : index
    %c0_2 = arith.constant 0 : index
    %1 = vector.load %arg3[%c0_1, %c0_2] : memref<128x1xf32, #tpu.memory_space<vmem>>, vector<128x1xf32>
    %c0_3 = arith.constant 0 : index
    %c0_4 = arith.constant 0 : index
    %2 = vector.load %arg1[%c0_3, %c0_4] : memref<128x32xf32, #tpu.memory_space<vmem>>, vector<128x4xf32>
    %cst = arith.constant dense<0.000000e+00> : vector<128x128xf32>
    %3 = tpu.matmul %0, %2, %cst {dimension_numbers = #tpu.dot_dimension_numbers<[1], [1], [0], [0], [0, 0, 1, 0], [], []>} : vector<128x4xf32>, vector<128x4xf32>, vector<128x128xf32> -> vector<128x128xf32>
    %4 = vector.broadcast %1 : vector<128x1xf32> to vector<128x128xf32>
    %5 = arith.addf %3, %4 : vector<128x128xf32>
    %cst_5 = arith.constant 0.000000e+00 : f32
    %6 = vector.broadcast %cst_5 : f32 to vector<128x128xf32>
    %7 = arith.maximumf %5, %6 : vector<128x128xf32>
    %c0_6 = arith.constant 0 : index
    %c0_7 = arith.constant 0 : index
    %8 = vector.load %arg9[%c0_6, %c0_7] : memref<128x128xf32, #tpu.memory_space<vmem>>, vector<128x128xf32>
    tpu.vector_store %arg9[%c0_6, %c0_7], %7 {strides = array<i32>} : memref<128x128xf32, #tpu.memory_space<vmem>>, vector<128x128xf32>,
    %c0_8 = arith.constant 0 : index
    %c4 = arith.constant 4 : index
    %9 = vector.load %arg1[%c0_8, %c4] : memref<128x32xf32, #tpu.memory_space<vmem>>, vector<128x4xf32>
    %cst_9 = arith.constant dense<0.000000e+00> : vector<128x128xf32>
    %10 = tpu.matmul %0, %9, %cst_9 {dimension_numbers = #tpu.dot_dimension_numbers<[1], [1], [0], [0], [0, 0, 1, 0], [], []>} : vector<128x4xf32>, vector<128x4xf32>, vector<128x128xf32> -> vector<128x128xf32>
    %11 = vector.broadcast %1 : vector<128x1xf32> to vector<128x128xf32>
    %12 = arith.addf %10, %11 : vector<128x128xf32>
    %cst_10 = arith.constant 0.000000e+00 : f32
    %13 = vector.broadcast %cst_10 : f32 to vector<128x128xf32>
    %14 = arith.maximumf %12, %13 : vector<128x128xf32>
    %c0_11 = arith.constant 0 : index
    %c0_12 = arith.constant 0 : index
    %15 = vector.load %arg9[%c0_11, %c0_12] : memref<128x128xf32, #tpu.memory_space<vmem>>, vector<128x128xf32>
    %16 = arith.addf %15, %14 : vector<128x128xf32>
    %c0_13 = arith.constant 0 : index
    %c0_14 = arith.constant 0 : index
    %17 = vector.load %arg9[%c0_13, %c0_14] : memref<128x128xf32, #tpu.memory_space<vmem>>, vector<128x128xf32>
    tpu.vector_store %arg9[%c0_13, %c0_14], %16 {strides = array<i32>} : memref<128x128xf32, #tpu.memory_space<vmem>>, vector<128x128xf32>,
    %c0_15 = arith.constant 0 : index
    %c8 = arith.constant 8 : index
    %18 = vector.load %arg1[%c0_15, %c8] : memref<128x32xf32, #tpu.memory_space<vmem>>, vector<128x4xf32>
    %cst_16 = arith.constant dense<0.000000e+00> : vector<128x128xf32>
    %19 = tpu.matmul %0, %18, %cst_16 {dimension_numbers = #tpu.dot_dimension_numbers<[1], [1], [0], [0], [0, 0, 1, 0], [], []>} : vector<128x4xf32>, vector<128x4xf32>, vector<128x128xf32> -> vector<128x128xf32>
    %20 = vector.broadcast %1 : vector<128x1xf32> to vector<128x128xf32>
    %21 = arith.addf %19, %20 : vector<128x128xf32>
    %cst_17 = arith.constant 0.000000e+00 : f32
    %22 = vector.broadcast %cst_17 : f32 to vector<128x128xf32>
    %23 = arith.maximumf %21, %22 : vector<128x128xf32>
    %c0_18 = arith.constant 0 : index
    %c0_19 = arith.constant 0 : index
    %24 = vector.load %arg9[%c0_18, %c0_19] : memref<128x128xf32, #tpu.memory_space<vmem>>, vector<128x128xf32>
    %25 = arith.addf %24, %23 : vector<128x128xf32>
    %c0_20 = arith.constant 0 : index
    %c0_21 = arith.constant 0 : index
    %26 = vector.load %arg9[%c0_20, %c0_21] : memref<128x128xf32, #tpu.memory_space<vmem>>, vector<128x128xf32>
    tpu.vector_store %arg9[%c0_20, %c0_21], %25 {strides = array<i32>} : memref<128x128xf32, #tpu.memory_space<vmem>>, vector<128x128xf32>,
    %c0_22 = arith.constant 0 : index
    %c12 = arith.constant 12 : index
    %27 = vector.load %arg1[%c0_22, %c12] : memref<128x32xf32, #tpu.memory_space<vmem>>, vector<128x4xf32>
    %cst_23 = arith.constant dense<0.000000e+00> : vector<128x128xf32>
    %28 = tpu.matmul %0, %27, %cst_23 {dimension_numbers = #tpu.dot_dimension_numbers<[1], [1], [0], [0], [0, 0, 1, 0], [], []>} : vector<128x4xf32>, vector<128x4xf32>, vector<128x128xf32> -> vector<128x128xf32>
    %29 = vector.broadcast %1 : vector<128x1xf32> to vector<128x128xf32>
    %30 = arith.addf %28, %29 : vector<128x128xf32>
    %cst_24 = arith.constant 0.000000e+00 : f32
    %31 = vector.broadcast %cst_24 : f32 to vector<128x128xf32>
    %32 = arith.maximumf %30, %31 : vector<128x128xf32>
    %c0_25 = arith.constant 0 : index
    %c0_26 = arith.constant 0 : index
    %33 = vector.load %arg9[%c0_25, %c0_26] : memref<128x128xf32, #tpu.memory_space<vmem>>, vector<128x128xf32>
    %34 = arith.addf %33, %32 : vector<128x128xf32>
    %c0_27 = arith.constant 0 : index
    %c0_28 = arith.constant 0 : index
    %35 = vector.load %arg9[%c0_27, %c0_28] : memref<128x128xf32, #tpu.memory_space<vmem>>, vector<128x128xf32>
    tpu.vector_store %arg9[%c0_27, %c0_28], %34 {strides = array<i32>} : memref<128x128xf32, #tpu.memory_space<vmem>>, vector<128x128xf32>,
    %c0_29 = arith.constant 0 : index
    %c16 = arith.constant 16 : index
    %36 = vector.load %arg1[%c0_29, %c16] : memref<128x32xf32, #tpu.memory_space<vmem>>, vector<128x4xf32>
    %cst_30 = arith.constant dense<0.000000e+00> : vector<128x128xf32>
    %37 = tpu.matmul %0, %36, %cst_30 {dimension_numbers = #tpu.dot_dimension_numbers<[1], [1], [0], [0], [0, 0, 1, 0], [], []>} : vector<128x4xf32>, vector<128x4xf32>, vector<128x128xf32> -> vector<128x128xf32>
    %38 = vector.broadcast %1 : vector<128x1xf32> to vector<128x128xf32>
    %39 = arith.addf %37, %38 : vector<128x128xf32>
    %cst_31 = arith.constant 0.000000e+00 : f32
    %40 = vector.broadcast %cst_31 : f32 to vector<128x128xf32>
    %41 = arith.maximumf %39, %40 : vector<128x128xf32>
    %c0_32 = arith.constant 0 : index
    %c0_33 = arith.constant 0 : index
    %42 = vector.load %arg9[%c0_32, %c0_33] : memref<128x128xf32, #tpu.memory_space<vmem>>, vector<128x128xf32>
    %43 = arith.addf %42, %41 : vector<128x128xf32>
    %c0_34 = arith.constant 0 : index
    %c0_35 = arith.constant 0 : index
    %44 = vector.load %arg9[%c0_34, %c0_35] : memref<128x128xf32, #tpu.memory_space<vmem>>, vector<128x128xf32>
    tpu.vector_store %arg9[%c0_34, %c0_35], %43 {strides = array<i32>} : memref<128x128xf32, #tpu.memory_space<vmem>>, vector<128x128xf32>,
    %c0_36 = arith.constant 0 : index
    %c20 = arith.constant 20 : index
    %45 = vector.load %arg1[%c0_36, %c20] : memref<128x32xf32, #tpu.memory_space<vmem>>, vector<128x4xf32>
    %cst_37 = arith.constant dense<0.000000e+00> : vector<128x128xf32>
    %46 = tpu.matmul %0, %45, %cst_37 {dimension_numbers = #tpu.dot_dimension_numbers<[1], [1], [0], [0], [0, 0, 1, 0], [], []>} : vector<128x4xf32>, vector<128x4xf32>, vector<128x128xf32> -> vector<128x128xf32>
    %47 = vector.broadcast %1 : vector<128x1xf32> to vector<128x128xf32>
    %48 = arith.addf %46, %47 : vector<128x128xf32>
    %cst_38 = arith.constant 0.000000e+00 : f32
    %49 = vector.broadcast %cst_38 : f32 to vector<128x128xf32>
    %50 = arith.maximumf %48, %49 : vector<128x128xf32>
    %c0_39 = arith.constant 0 : index
    %c0_40 = arith.constant 0 : index
    %51 = vector.load %arg9[%c0_39, %c0_40] : memref<128x128xf32, #tpu.memory_space<vmem>>, vector<128x128xf32>
    %52 = arith.addf %51, %50 : vector<128x128xf32>
    %c0_41 = arith.constant 0 : index
    %c0_42 = arith.constant 0 : index
    %53 = vector.load %arg9[%c0_41, %c0_42] : memref<128x128xf32, #tpu.memory_space<vmem>>, vector<128x128xf32>
    tpu.vector_store %arg9[%c0_41, %c0_42], %52 {strides = array<i32>} : memref<128x128xf32, #tpu.memory_space<vmem>>, vector<128x128xf32>,
    %c0_43 = arith.constant 0 : index
    %c24 = arith.constant 24 : index
    %54 = vector.load %arg1[%c0_43, %c24] : memref<128x32xf32, #tpu.memory_space<vmem>>, vector<128x4xf32>
    %cst_44 = arith.constant dense<0.000000e+00> : vector<128x128xf32>
    %55 = tpu.matmul %0, %54, %cst_44 {dimension_numbers = #tpu.dot_dimension_numbers<[1], [1], [0], [0], [0, 0, 1, 0], [], []>} : vector<128x4xf32>, vector<128x4xf32>, vector<128x128xf32> -> vector<128x128xf32>
    %56 = vector.broadcast %1 : vector<128x1xf32> to vector<128x128xf32>
    %57 = arith.addf %55, %56 : vector<128x128xf32>
    %cst_45 = arith.constant 0.000000e+00 : f32
    %58 = vector.broadcast %cst_45 : f32 to vector<128x128xf32>
    %59 = arith.maximumf %57, %58 : vector<128x128xf32>
    %c0_46 = arith.constant 0 : index
    %c0_47 = arith.constant 0 : index
    %60 = vector.load %arg9[%c0_46, %c0_47] : memref<128x128xf32, #tpu.memory_space<vmem>>, vector<128x128xf32>
    %61 = arith.addf %60, %59 : vector<128x128xf32>
    %c0_48 = arith.constant 0 : index
    %c0_49 = arith.constant 0 : index
    %62 = vector.load %arg9[%c0_48, %c0_49] : memref<128x128xf32, #tpu.memory_space<vmem>>, vector<128x128xf32>
    tpu.vector_store %arg9[%c0_48, %c0_49], %61 {strides = array<i32>} : memref<128x128xf32, #tpu.memory_space<vmem>>, vector<128x128xf32>,
    %c0_50 = arith.constant 0 : index
    %c28 = arith.constant 28 : index
    %63 = vector.load %arg1[%c0_50, %c28] : memref<128x32xf32, #tpu.memory_space<vmem>>, vector<128x4xf32>
    %cst_51 = arith.constant dense<0.000000e+00> : vector<128x128xf32>
    %64 = tpu.matmul %0, %63, %cst_51 {dimension_numbers = #tpu.dot_dimension_numbers<[1], [1], [0], [0], [0, 0, 1, 0], [], []>} : vector<128x4xf32>, vector<128x4xf32>, vector<128x128xf32> -> vector<128x128xf32>
    %65 = vector.broadcast %1 : vector<128x1xf32> to vector<128x128xf32>
    %66 = arith.addf %64, %65 : vector<128x128xf32>
    %cst_52 = arith.constant 0.000000e+00 : f32
    %67 = vector.broadcast %cst_52 : f32 to vector<128x128xf32>
    %68 = arith.maximumf %66, %67 : vector<128x128xf32>
    %c0_53 = arith.constant 0 : index
    %c0_54 = arith.constant 0 : index
    %69 = vector.load %arg9[%c0_53, %c0_54] : memref<128x128xf32, #tpu.memory_space<vmem>>, vector<128x128xf32>
    %70 = arith.addf %69, %68 : vector<128x128xf32>
    %c0_55 = arith.constant 0 : index
    %c0_56 = arith.constant 0 : index
    %71 = vector.load %arg9[%c0_55, %c0_56] : memref<128x128xf32, #tpu.memory_space<vmem>>, vector<128x128xf32>
    tpu.vector_store %arg9[%c0_55, %c0_56], %70 {strides = array<i32>} : memref<128x128xf32, #tpu.memory_space<vmem>>, vector<128x128xf32>,
    %c0_57 = arith.constant 0 : index
    %c0_58 = arith.constant 0 : index
    %72 = vector.load %arg9[%c0_57, %c0_58] : memref<128x128xf32, #tpu.memory_space<vmem>>, vector<128x128xf32>
    %cst_59 = arith.constant 1.250000e-01 : f32
    %73 = vector.broadcast %cst_59 : f32 to vector<128x128xf32>
    %74 = arith.mulf %72, %73 : vector<128x128xf32>
    %c0_60 = arith.constant 0 : index
    %c0_61 = arith.constant 0 : index
    %75 = vector.load %arg4[%c0_60, %c0_61] : memref<128x128xf32, #tpu.memory_space<vmem>>, vector<128x128xf32>
    %cst_62 = arith.constant dense<0.000000e+00> : vector<128x128xf32>
    %76 = tpu.matmul %75, %74, %cst_62 {dimension_numbers = #tpu.dot_dimension_numbers<[1], [0], [0], [1], [0, 0, 1, 1], [], []>} : vector<128x128xf32>, vector<128x128xf32>, vector<128x128xf32> -> vector<128x128xf32>
    %c0_63 = arith.constant 0 : index
    %c0_64 = arith.constant 0 : index
    %77 = vector.load %arg5[%c0_63, %c0_64] : memref<128x1xf32, #tpu.memory_space<vmem>>, vector<128x1xf32>
    %78 = vector.broadcast %77 : vector<128x1xf32> to vector<128x128xf32>
    %79 = arith.addf %76, %78 : vector<128x128xf32>
    %cst_65 = arith.constant 0.000000e+00 : f32
    %80 = vector.broadcast %cst_65 : f32 to vector<128x128xf32>
    %81 = arith.maximumf %79, %80 : vector<128x128xf32>
    %c0_66 = arith.constant 0 : index
    %c0_67 = arith.constant 0 : index
    %82 = vector.load %arg6[%c0_66, %c0_67] : memref<128x1xf32, #tpu.memory_space<vmem>>, vector<128x1xf32>
    %83 = vector.broadcast %82 : vector<128x1xf32> to vector<128x128xf32>
    %84 = arith.mulf %81, %83 : vector<128x128xf32>
    %cst_68 = arith.constant dense<0.000000e+00> : vector<128xf32>
    %85 = vector.multi_reduction <add>, %84, %cst_68 [0] : vector<128x128xf32> to vector<128xf32>
    %86 = vector.shape_cast %85 : vector<128xf32> to vector<1x128xf32>
    %c0_69 = arith.constant 0 : index
    %c0_70 = arith.constant 0 : index
    %87 = memref.load %arg7[%c0_69, %c0_70] : memref<1x1xf32, #tpu.memory_space<smem>>
    %88 = vector.broadcast %87 : f32 to vector<1x128xf32>
    %89 = arith.addf %86, %88 : vector<1x128xf32>
    %90 = arith.negf %89 : vector<1x128xf32>
    %91 = math.exp %90 : vector<1x128xf32>
    %cst_71 = arith.constant 1.000000e+00 : f32
    %92 = vector.broadcast %cst_71 : f32 to vector<1x128xf32>
    %93 = arith.addf %92, %91 : vector<1x128xf32>
    %94 = arith.divf %92, %93 : vector<1x128xf32>
    %c0_72 = arith.constant 0 : index
    %c0_73 = arith.constant 0 : index
    %95 = vector.load %arg8[%c0_72, %c0_73] : memref<1x128xf32, #tpu.memory_space<vmem>>, vector<1x128xf32>
    tpu.vector_store %arg8[%c0_72, %c0_73], %94 {strides = array<i32>} : memref<1x128xf32, #tpu.memory_space<vmem>>, vector<1x128xf32>,
    return
  }
  func.func @transform_0(%arg0: i32) -> (i32, i32) {
    %c0_i32 = arith.constant 0 : i32
    %c0_i32_0 = arith.constant 0 : i32
    return %arg0, %c0_i32 : i32, i32
  }
  func.func @transform_1(%arg0: i32) -> (i32, i32) {
    %c0_i32 = arith.constant 0 : i32
    %c0_i32_0 = arith.constant 0 : i32
    %c0_i32_1 = arith.constant 0 : i32
    return %c0_i32, %c0_i32_0 : i32, i32
  }
  func.func @transform_2(%arg0: i32) -> (i32, i32) {
    %c0_i32 = arith.constant 0 : i32
    %c0_i32_0 = arith.constant 0 : i32
    %c0_i32_1 = arith.constant 0 : i32
    return %c0_i32, %c0_i32_0 : i32, i32
  }
  func.func @transform_3(%arg0: i32) -> (i32, i32) {
    %c0_i32 = arith.constant 0 : i32
    %c0_i32_0 = arith.constant 0 : i32
    %c0_i32_1 = arith.constant 0 : i32
    return %c0_i32, %c0_i32_0 : i32, i32
  }
  func.func @transform_4(%arg0: i32) -> (i32, i32) {
    %c0_i32 = arith.constant 0 : i32
    %c0_i32_0 = arith.constant 0 : i32
    %c0_i32_1 = arith.constant 0 : i32
    return %c0_i32, %c0_i32_0 : i32, i32
  }
  func.func @transform_5(%arg0: i32) -> (i32, i32) {
    %c0_i32 = arith.constant 0 : i32
    %c0_i32_0 = arith.constant 0 : i32
    %c0_i32_1 = arith.constant 0 : i32
    return %c0_i32, %c0_i32_0 : i32, i32
  }
  func.func @transform_6(%arg0: i32) -> (i32, i32) {
    %c0_i32 = arith.constant 0 : i32
    %c0_i32_0 = arith.constant 0 : i32
    %c0_i32_1 = arith.constant 0 : i32
    return %c0_i32, %c0_i32_0 : i32, i32
  }
  func.func @transform_7(%arg0: i32) -> (i32, i32) {
    %c0_i32 = arith.constant 0 : i32
    %c0_i32_0 = arith.constant 0 : i32
    return %arg0, %c0_i32 : i32, i32
  }
}

</mosaic_0001>

<llo_original>
// kernel: jet_classifier_forward.1
$region0: #{jet_classifier_forward.1}
  #allocation0 [shape = 'u32[]', space=smem, size = 0x4, offset = 0x4, fixed_abs, tag = 'smem constant byte address 0x4 - core index']
  #allocation1 [shape = 'u32[144,128]{1,0:T(1,128)}', space=vmem, size = 0x12000, scoped, tag = 'internal scratch']
  #allocation2 [shape = 'f32[128,128]{1,0:T(8,128)}', space=vmem, size = 0x10000, scoped, tag = 'scratch operand']
  #allocation3 [shape = 'f32[1,1]{1,0:T(1,128)S(6)}', space=smem, size = 0x200, scoped, tag = 'scoped memory for jet_classifier_forward.1']
  %s0 = inlined_call_operand.vmem [shape: f32[128,32], index: 0, kind: input, shape index: {}]
  %s1 = inlined_call_operand.vmem [shape: f32[128,4], index: 1, kind: input, shape index: {}]
  %s2 = inlined_call_operand.vmem [shape: f32[128,1], index: 2, kind: input, shape index: {}]
  %s3 = inlined_call_operand.vmem [shape: f32[128,128], index: 3, kind: input, shape index: {}]
  %s4 = inlined_call_operand.vmem [shape: f32[128,1], index: 4, kind: input, shape index: {}]
  %s5 = inlined_call_operand.vmem [shape: f32[128,1], index: 5, kind: input, shape index: {}]
  %s6 = inlined_call_operand.<no memory space> [shape: f32[1,1], index: 6, kind: input, shape index: {}]
  %s7 = inlined_call_operand.vmem [shape: f32[1,128], index: 7, kind: output, shape index: {}]
  %s8 = sld [smem:[#allocation0]]
  $region38: #{jet_classifier_forward.1} parent=0
    _
  %s10 = ssub.s32 1, %s8
  %s11 = scalar_select 0, %s10, %s8
  %12 = sst [smem:[#allocation3]] %s6
  // Predicated region
  $region2: #{jet_classifier_forward.1} parent=0 // pred_check
    _
  $region3: #{jet_classifier_forward.1} parent=0 // pred_check_branch
    %14 = sbr.rel (0) target = $region5
  $region4: #{jet_classifier_forward.1} parent=0 // pred_region
    _
  $region5: #{jet_classifier_forward.1} parent=0 // pred_fallthru
    _
  // Predicated region
  $region6: #{jet_classifier_forward.1} parent=0 // pred_check
    _
  $region7: #{jet_classifier_forward.1} parent=0 // pred_check_branch
    %16 = sbr.rel (0) target = $region9
  $region8: #{jet_classifier_forward.1} parent=0 // pred_region
    _
  $region9: #{jet_classifier_forward.1} parent=0 // pred_fallthru
    _
  // Predicated region
  $region10: #{jet_classifier_forward.1} parent=0 // pred_check
    _
  $region11: #{jet_classifier_forward.1} parent=0 // pred_check_branch
    %18 = sbr.rel (0) target = $region13
  $region12: #{jet_classifier_forward.1} parent=0 // pred_region
    _
  $region13: #{jet_classifier_forward.1} parent=0 // pred_fallthru
    _
  // Predicated region
  $region14: #{jet_classifier_forward.1} parent=0 // pred_check
    _
  $region15: #{jet_classifier_forward.1} parent=0 // pred_check_branch
    %20 = sbr.rel (0) target = $region17
  $region16: #{jet_classifier_forward.1} parent=0 // pred_region
    _
  $region17: #{jet_classifier_forward.1} parent=0 // pred_fallthru
    _
  // Predicated region
  $region18: #{jet_classifier_forward.1} parent=0 // pred_check
    _
  $region19: #{jet_classifier_forward.1} parent=0 // pred_check_branch
    %22 = sbr.rel (0) target = $region21
  $region20: #{jet_classifier_forward.1} parent=0 // pred_region
    _
  $region21: #{jet_classifier_forward.1} parent=0 // pred_fallthru
    _
  // Predicated region
  $region22: #{jet_classifier_forward.1} parent=0 // pred_check
    _
  $region23: #{jet_classifier_forward.1} parent=0 // pred_check_branch
    %24 = sbr.rel (0) target = $region25
  $region24: #{jet_classifier_forward.1} parent=0 // pred_region
    _
  $region25: #{jet_classifier_forward.1} parent=0 // pred_fallthru
    _
  // Predicated region
  $region26: #{jet_classifier_forward.1} parent=0 // pred_check
    _
  $region27: #{jet_classifier_forward.1} parent=0 // pred_check_branch
    %26 = sbr.rel (0) target = $region29
  $region28: #{jet_classifier_forward.1} parent=0 // pred_region
    _
  $region29: #{jet_classifier_forward.1} parent=0 // pred_fallthru
    _
  %v27 = vld [vmem:[%s1] sm:$0xff]
  %v28 = vld [vmem:[%s1 + $0x8] sm:$0xff]
  %v29 = vld [vmem:[%s1 + $0x10] sm:$0xff]
  %v30 = vld [vmem:[%s1 + $0x18] sm:$0xff]
  %v31 = vld [vmem:[%s1 + $0x20] sm:$0xff]
  %v32 = vld [vmem:[%s1 + $0x28] sm:$0xff]
  %v33 = vld [vmem:[%s1 + $0x30] sm:$0xff]
  %v34 = vld [vmem:[%s1 + $0x38] sm:$0xff]
  %v35 = vld [vmem:[%s1 + $0x40] sm:$0xff]
  %v36 = vld [vmem:[%s1 + $0x48] sm:$0xff]
  %v37 = vld [vmem:[%s1 + $0x50] sm:$0xff]
  %v38 = vld [vmem:[%s1 + $0x58] sm:$0xff]
  %v39 = vld [vmem:[%s1 + $0x60] sm:$0xff]
  %v40 = vld [vmem:[%s1 + $0x68] sm:$0xff]
  %v41 = vld [vmem:[%s1 + $0x70] sm:$0xff]
  %v42 = vld [vmem:[%s1 + $0x78] sm:$0xff]
  %v43 = vld [vmem:[%s2] sm:$0xff]
  %v44 = vld [vmem:[%s2 + $0x8] sm:$0xff]
  %v45 = vld [vmem:[%s2 + $0x10] sm:$0xff]
  %v46 = vld [vmem:[%s2 + $0x18] sm:$0xff]
  %v47 = vld [vmem:[%s2 + $0x20] sm:$0xff]
  %v48 = vld [vmem:[%s2 + $0x28] sm:$0xff]
  %v49 = vld [vmem:[%s2 + $0x30] sm:$0xff]
  %v50 = vld [vmem:[%s2 + $0x38] sm:$0xff]
  %v51 = vld [vmem:[%s2 + $0x40] sm:$0xff]
  %v52 = vld [vmem:[%s2 + $0x48] sm:$0xff]
  %v53 = vld [vmem:[%s2 + $0x50] sm:$0xff]
  %v54 = vld [vmem:[%s2 + $0x58] sm:$0xff]
  %v55 = vld [vmem:[%s2 + $0x60] sm:$0xff]
  %v56 = vld [vmem:[%s2 + $0x68] sm:$0xff]
  %v57 = vld [vmem:[%s2 + $0x70] sm:$0xff]
  %v58 = vld [vmem:[%s2 + $0x78] sm:$0xff]
  %v59 = vld [vmem:[%s0] sm:$0xff]
  %v60 = vld [vmem:[%s0 + $0x8] sm:$0xff]
  %v61 = vld [vmem:[%s0 + $0x10] sm:$0xff]
  %v62 = vld [vmem:[%s0 + $0x18] sm:$0xff]
  %v63 = vld [vmem:[%s0 + $0x20] sm:$0xff]
  %v64 = vld [vmem:[%s0 + $0x28] sm:$0xff]
  %v65 = vld [vmem:[%s0 + $0x30] sm:$0xff]
  %v66 = vld [vmem:[%s0 + $0x38] sm:$0xff]
  %v67 = vld [vmem:[%s0 + $0x40] sm:$0xff]
  %v68 = vld [vmem:[%s0 + $0x48] sm:$0xff]
  %v69 = vld [vmem:[%s0 + $0x50] sm:$0xff]
  %v70 = vld [vmem:[%s0 + $0x58] sm:$0xff]
  %v71 = vld [vmem:[%s0 + $0x60] sm:$0xff]
  %v72 = vld [vmem:[%s0 + $0x68] sm:$0xff]
  %v73 = vld [vmem:[%s0 + $0x70] sm:$0xff]
  %v74 = vld [vmem:[%s0 + $0x78] sm:$0xff]
  %76 = vset.pattern.permute.xlu0 0
  %77 = vperm.xlu0 %76, %v43
  %v78 = vpop.permute.xlu0 %77
  %81 = vset.pattern.permute.xlu0 0
  %82 = vperm.xlu0 %81, %v44
  %v83 = vpop.permute.xlu0 %82
  %86 = vset.pattern.permute.xlu0 0
  %87 = vperm.xlu0 %86, %v45
  %v88 = vpop.permute.xlu0 %87
  %91 = vset.pattern.permute.xlu0 0
  %92 = vperm.xlu0 %91, %v46
  %v93 = vpop.permute.xlu0 %92
  %96 = vset.pattern.permute.xlu0 0
  %97 = vperm.xlu0 %96, %v47
  %v98 = vpop.permute.xlu0 %97
  %101 = vset.pattern.permute.xlu0 0
  %102 = vperm.xlu0 %101, %v48
  %v103 = vpop.permute.xlu0 %102
  %106 = vset.pattern.permute.xlu0 0
  %107 = vperm.xlu0 %106, %v49
  %v108 = vpop.permute.xlu0 %107
  %111 = vset.pattern.permute.xlu0 0
  %112 = vperm.xlu0 %111, %v50
  %v113 = vpop.permute.xlu0 %112
  %116 = vset.pattern.permute.xlu0 0
  %117 = vperm.xlu0 %116, %v51
  %v118 = vpop.permute.xlu0 %117
  %121 = vset.pattern.permute.xlu0 0
  %122 = vperm.xlu0 %121, %v52
  %v123 = vpop.permute.xlu0 %122
  %126 = vset.pattern.permute.xlu0 0
  %127 = vperm.xlu0 %126, %v53
  %v128 = vpop.permute.xlu0 %127
  %131 = vset.pattern.permute.xlu0 0
  %132 = vperm.xlu0 %131, %v54
  %v133 = vpop.permute.xlu0 %132
  %136 = vset.pattern.permute.xlu0 0
  %137 = vperm.xlu0 %136, %v55
  %v138 = vpop.permute.xlu0 %137
  %141 = vset.pattern.permute.xlu0 0
  %142 = vperm.xlu0 %141, %v56
  %v143 = vpop.permute.xlu0 %142
  %146 = vset.pattern.permute.xlu0 0
  %147 = vperm.xlu0 %146, %v57
  %v148 = vpop.permute.xlu0 %147
  %151 = vset.pattern.permute.xlu0 0
  %152 = vperm.xlu0 %151, %v58
  %v153 = vpop.permute.xlu0 %152
  %vm155 = vcmask 31744
  %v157 = vsel %vm155, %v27, 0
  %v160 = vsel %vm155, %v28, 0
  %v163 = vsel %vm155, %v29, 0
  %v166 = vsel %vm155, %v30, 0
  %v169 = vsel %vm155, %v31, 0
  %v172 = vsel %vm155, %v32, 0
  %v175 = vsel %vm155, %v33, 0
  %v178 = vsel %vm155, %v34, 0
  %v181 = vsel %vm155, %v35, 0
  %v184 = vsel %vm155, %v36, 0
  %v187 = vsel %vm155, %v37, 0
  %v190 = vsel %vm155, %v38, 0
  %v193 = vsel %vm155, %v39, 0
  %v196 = vsel %vm155, %v40, 0
  %v199 = vsel %vm155, %v41, 0
  %v202 = vsel %vm155, %v42, 0
  %v205 = vsel %vm155, %v59, 0
  %v208 = vsel %vm155, %v60, 0
  %v211 = vsel %vm155, %v61, 0
  %v214 = vsel %vm155, %v62, 0
  %v217 = vsel %vm155, %v63, 0
  %v220 = vsel %vm155, %v64, 0
  %v223 = vsel %vm155, %v65, 0
  %v226 = vsel %vm155, %v66, 0
  %v229 = vsel %vm155, %v67, 0
  %v232 = vsel %vm155, %v68, 0
  %v235 = vsel %vm155, %v69, 0
  %v238 = vsel %vm155, %v70, 0
  %v241 = vsel %vm155, %v71, 0
  %v244 = vsel %vm155, %v72, 0
  %v247 = vsel %vm155, %v73, 0
  %v250 = vsel %vm155, %v74, 0
  %252 = vmatprep.subr.mxu0 0.0
  %253 = vmatpush1.xpose.msra.mxu0 %v250
  %254 = vmatprep.subr.mxu0 0.0
  %255 = vmatpush1.xpose.msra.mxu0 %v247
  %256 = vmatprep.subr.mxu0 0.0
  %257 = vmatpush1.xpose.msra.mxu0 %v244
  %258 = vmatprep.subr.mxu0 0.0
  %259 = vmatpush1.xpose.msra.mxu0 %v241
  %260 = vmatprep.subr.mxu0 0.0
  %261 = vmatpush1.xpose.msra.mxu0 %v238
  %262 = vmatprep.subr.mxu0 0.0
  %263 = vmatpush1.xpose.msra.mxu0 %v235
  %264 = vmatprep.subr.mxu0 0.0
  %265 = vmatpush1.xpose.msra.mxu0 %v232
  %266 = vmatprep.subr.mxu0 0.0
  %267 = vmatpush1.xpose.msra.mxu0 %v229
  %268 = vmatprep.subr.mxu0 0.0
  %269 = vmatpush1.xpose.msra.mxu0 %v226
  %270 = vmatprep.subr.mxu0 0.0
  %271 = vmatpush1.xpose.msra.mxu0 %v223
  %272 = vmatprep.subr.mxu0 0.0
  %273 = vmatpush1.xpose.msra.mxu0 %v220
  %274 = vmatprep.subr.mxu0 0.0
  %275 = vmatpush1.xpose.msra.mxu0 %v217
  %276 = vmatprep.subr.mxu0 0.0
  %277 = vmatpush1.xpose.msra.mxu0 %v214
  %278 = vmatprep.subr.mxu0 0.0
  %279 = vmatpush1.xpose.msra.mxu0 %v211
  %280 = vmatprep.subr.mxu0 0.0
  %281 = vmatpush1.xpose.msra.mxu0 %v208
  %282 = vmatprep.subr.mxu0 0.0
  %283 = vmatpush1.xpose.msra.mxu0 %v205
  %284 = vmatprep.subr.mxu0 0.0
  %285 = vmatpush2.xpose.msra.mxu0 0.0
  %286 = vmatprep.subr.mxu0 0.0
  %287 = vmatpush2.xpose.msra.mxu0 0.0
  %288 = vmatprep.subr.mxu0 0.0
  %289 = vmatpush2.xpose.msra.mxu0 0.0
  %290 = vmatprep.subr.mxu0 0.0
  %291 = vmatpush2.xpose.msra.mxu0 0.0
  %292 = vmatprep.subr.mxu0 0.0
  %293 = vmatpush2.xpose.msra.mxu0 0.0
  %294 = vmatprep.subr.mxu0 0.0
  %295 = vmatpush2.xpose.msra.mxu0 0.0
  %296 = vmatprep.subr.mxu0 0.0
  %297 = vmatpush2.xpose.msra.mxu0 0.0
  %298 = vmatprep.subr.mxu0 0.0
  %299 = vmatpush2.xpose.msra.mxu0 0.0
  %300 = vmatprep.subr.mxu0 0.0
  %301 = vmatpush2.xpose.msra.mxu0 0.0
  %302 = vmatprep.subr.mxu0 0.0
  %303 = vmatpush2.xpose.msra.mxu0 0.0
  %304 = vmatprep.subr.mxu0 0.0
  %305 = vmatpush2.xpose.msra.mxu0 0.0
  %306 = vmatprep.subr.mxu0 0.0
  %307 = vmatpush2.xpose.msra.mxu0 0.0
  %308 = vmatprep.subr.mxu0 0.0
  %309 = vmatpush2.xpose.msra.mxu0 0.0
  %310 = vmatprep.subr.mxu0 0.0
  %311 = vmatpush2.xpose.msra.mxu0 0.0
  %312 = vmatprep.subr.mxu0 0.0
  %313 = vmatpush2.xpose.msra.mxu0 0.0
  %314 = vmatprep.subr.mxu0 0.0
  %315 = vmatpush2.xpose.msra.mxu0 0.0
  %316 = vmatprep.mubr.f32.mxu0 0.0
  %317 = vmatmul.mubr.f32.gmra.mxu0 %v157
  %v318 = vpop.f32.mrf.mxu0
  %v319 = vadd.f32 %v78, %v318
  %v320 = vpop.f32.mrf.mxu0
  %321 = vmatprep.mubr.f32.mxu0 0.0
  %322 = vmatmul.mubr.f32.gmra.mxu0 %v160
  %v323 = vpop.f32.mrf.mxu0
  %v324 = vadd.f32 %v83, %v323
  %v325 = vpop.f32.mrf.mxu0
  %326 = vmatprep.mubr.f32.mxu0 0.0
  %327 = vmatmul.mubr.f32.gmra.mxu0 %v163
  %v328 = vpop.f32.mrf.mxu0
  %v329 = vadd.f32 %v88, %v328
  %v330 = vpop.f32.mrf.mxu0
  %331 = vmatprep.mubr.f32.mxu0 0.0
  %332 = vmatmul.mubr.f32.gmra.mxu0 %v166
  %v333 = vpop.f32.mrf.mxu0
  %v334 = vadd.f32 %v93, %v333
  %v335 = vpop.f32.mrf.mxu0
  %336 = vmatprep.mubr.f32.mxu0 0.0
  %337 = vmatmul.mubr.f32.gmra.mxu0 %v169
  %v338 = vpop.f32.mrf.mxu0
  %v339 = vadd.f32 %v98, %v338
  %v340 = vpop.f32.mrf.mxu0
  %341 = vmatprep.mubr.f32.mxu0 0.0
  %342 = vmatmul.mubr.f32.gmra.mxu0 %v172
  %v343 = vpop.f32.mrf.mxu0
  %v344 = vadd.f32 %v103, %v343
  %v345 = vpop.f32.mrf.mxu0
  %346 = vmatprep.mubr.f32.mxu0 0.0
  %347 = vmatmul.mubr.f32.gmra.mxu0 %v175
  %v348 = vpop.f32.mrf.mxu0
  %v349 = vadd.f32 %v108, %v348
  %v350 = vpop.f32.mrf.mxu0
  %351 = vmatprep.mubr.f32.mxu0 0.0
  %352 = vmatmul.mubr.f32.gmra.mxu0 %v178
  %v353 = vpop.f32.mrf.mxu0
  %v354 = vadd.f32 %v113, %v353
  %v355 = vpop.f32.mrf.mxu0
  %356 = vmatprep.mubr.f32.mxu0 0.0
  %357 = vmatmul.mubr.f32.gmra.mxu0 %v181
  %v358 = vpop.f32.mrf.mxu0
  %v359 = vadd.f32 %v118, %v358
  %v360 = vpop.f32.mrf.mxu0
  %361 = vmatprep.mubr.f32.mxu0 0.0
  %362 = vmatmul.mubr.f32.gmra.mxu0 %v184
  %v363 = vpop.f32.mrf.mxu0
  %v364 = vadd.f32 %v123, %v363
  %v365 = vpop.f32.mrf.mxu0
  %366 = vmatprep.mubr.f32.mxu0 0.0
  %367 = vmatmul.mubr.f32.gmra.mxu0 %v187
  %v368 = vpop.f32.mrf.mxu0
  %v369 = vadd.f32 %v128, %v368
  %v370 = vpop.f32.mrf.mxu0
  %371 = vmatprep.mubr.f32.mxu0 0.0
  %372 = vmatmul.mubr.f32.gmra.mxu0 %v190
  %v373 = vpop.f32.mrf.mxu0
  %v374 = vadd.f32 %v133, %v373
  %v375 = vpop.f32.mrf.mxu0
  %376 = vmatprep.mubr.f32.mxu0 0.0
  %377 = vmatmul.mubr.f32.gmra.mxu0 %v193
  %v378 = vpop.f32.mrf.mxu0
  %v379 = vadd.f32 %v138, %v378
  %v380 = vpop.f32.mrf.mxu0
  %381 = vmatprep.mubr.f32.mxu0 0.0
  %382 = vmatmul.mubr.f32.gmra.mxu0 %v196
  %v383 = vpop.f32.mrf.mxu0
  %v384 = vadd.f32 %v143, %v383
  %v385 = vpop.f32.mrf.mxu0
  %386 = vmatprep.mubr.f32.mxu0 0.0
  %387 = vmatmul.mubr.f32.gmra.mxu0 %v199
  %v388 = vpop.f32.mrf.mxu0
  %v389 = vadd.f32 %v148, %v388
  %v390 = vpop.f32.mrf.mxu0
  %391 = vmatprep.mubr.f32.mxu0 0.0
  %392 = vmatmul.mubr.f32.gmra.mxu0 %v202
  %v393 = vpop.f32.mrf.mxu0
  %v394 = vadd.f32 %v153, %v393
  %v395 = vpop.f32.mrf.mxu0
  %396 = vdwg.mxu0
  %v397 = vmax.f32 %v319, 0.0
  %v398 = vmax.f32 %v324, 0.0
  %v399 = vmax.f32 %v329, 0.0
  %v400 = vmax.f32 %v334, 0.0
  %v401 = vmax.f32 %v339, 0.0
  %v402 = vmax.f32 %v344, 0.0
  %v403 = vmax.f32 %v349, 0.0
  %v404 = vmax.f32 %v354, 0.0
  %v405 = vmax.f32 %v359, 0.0
  %v406 = vmax.f32 %v364, 0.0
  %v407 = vmax.f32 %v369, 0.0
  %v408 = vmax.f32 %v374, 0.0
  %v409 = vmax.f32 %v379, 0.0
  %v410 = vmax.f32 %v384, 0.0
  %v411 = vmax.f32 %v389, 0.0
  %v412 = vmax.f32 %v394, 0.0
  %413 = vst [vmem:[#allocation2] sm:$0xff] %v397
  %414 = vst [vmem:[#allocation2 + $0x8] sm:$0xff] %v398
  %415 = vst [vmem:[#allocation2 + $0x10] sm:$0xff] %v399
  %416 = vst [vmem:[#allocation2 + $0x18] sm:$0xff] %v400
  %417 = vst [vmem:[#allocation2 + $0x20] sm:$0xff] %v401
  %418 = vst [vmem:[#allocation2 + $0x28] sm:$0xff] %v402
  %419 = vst [vmem:[#allocation2 + $0x30] sm:$0xff] %v403
  %420 = vst [vmem:[#allocation2 + $0x38] sm:$0xff] %v404
  %421 = vst [vmem:[#allocation2 + $0x40] sm:$0xff] %v405
  %422 = vst [vmem:[#allocation2 + $0x48] sm:$0xff] %v406
  %423 = vst [vmem:[#allocation2 + $0x50] sm:$0xff] %v407
  %424 = vst [vmem:[#allocation2 + $0x58] sm:$0xff] %v408
  %425 = vst [vmem:[#allocation2 + $0x60] sm:$0xff] %v409
  %426 = vst [vmem:[#allocation2 + $0x68] sm:$0xff] %v410
  %427 = vst [vmem:[#allocation2 + $0x70] sm:$0xff] %v411
  %428 = vst [vmem:[#allocation2 + $0x78] sm:$0xff] %v412
  %v429 = vld [vmem:[%s0] sm:$0xff]
  %v430 = vld [vmem:[%s0 + $0x8] sm:$0xff]
  %v431 = vld [vmem:[%s0 + $0x10] sm:$0xff]
  %v432 = vld [vmem:[%s0 + $0x18] sm:$0xff]
  %v433 = vld [vmem:[%s0 + $0x20] sm:$0xff]
  %v434 = vld [vmem:[%s0 + $0x28] sm:$0xff]
  %v435 = vld [vmem:[%s0 + $0x30] sm:$0xff]
  %v436 = vld [vmem:[%s0 + $0x38] sm:$0xff]
  %v437 = vld [vmem:[%s0 + $0x40] sm:$0xff]
  %v438 = vld [vmem:[%s0 + $0x48] sm:$0xff]
  %v439 = vld [vmem:[%s0 + $0x50] sm:$0xff]
  %v440 = vld [vmem:[%s0 + $0x58] sm:$0xff]
  %v441 = vld [vmem:[%s0 + $0x60] sm:$0xff]
  %v442 = vld [vmem:[%s0 + $0x68] sm:$0xff]
  %v443 = vld [vmem:[%s0 + $0x70] sm:$0xff]
  %v444 = vld [vmem:[%s0 + $0x78] sm:$0xff]
  %461 = vrot.lane.b32.xlu0 %v429, 124
  %v462 = vpop.permute.xlu0 %461
  %463 = vrot.lane.b32.xlu0 %v430, 124
  %v464 = vpop.permute.xlu0 %463
  %465 = vrot.lane.b32.xlu0 %v431, 124
  %v466 = vpop.permute.xlu0 %465
  %467 = vrot.lane.b32.xlu0 %v432, 124
  %v468 = vpop.permute.xlu0 %467
  %469 = vrot.lane.b32.xlu0 %v433, 124
  %v470 = vpop.permute.xlu0 %469
  %471 = vrot.lane.b32.xlu0 %v434, 124
  %v472 = vpop.permute.xlu0 %471
  %473 = vrot.lane.b32.xlu0 %v435, 124
  %v474 = vpop.permute.xlu0 %473
  %475 = vrot.lane.b32.xlu0 %v436, 124
  %v476 = vpop.permute.xlu0 %475
  %477 = vrot.lane.b32.xlu0 %v437, 124
  %v478 = vpop.permute.xlu0 %477
  %479 = vrot.lane.b32.xlu0 %v438, 124
  %v480 = vpop.permute.xlu0 %479
  %481 = vrot.lane.b32.xlu0 %v439, 124
  %v482 = vpop.permute.xlu0 %481
  %483 = vrot.lane.b32.xlu0 %v440, 124
  %v484 = vpop.permute.xlu0 %483
  %485 = vrot.lane.b32.xlu0 %v441, 124
  %v486 = vpop.permute.xlu0 %485
  %487 = vrot.lane.b32.xlu0 %v442, 124
  %v488 = vpop.permute.xlu0 %487
  %489 = vrot.lane.b32.xlu0 %v443, 124
  %v490 = vpop.permute.xlu0 %489
  %491 = vrot.lane.b32.xlu0 %v444, 124
  %v492 = vpop.permute.xlu0 %491
  %v493 = vsel %vm155, %v462, 0
  %v495 = vsel %vm155, %v464, 0
  %v497 = vsel %vm155, %v466, 0
  %v499 = vsel %vm155, %v468, 0
  %v501 = vsel %vm155, %v470, 0
  %v503 = vsel %vm155, %v472, 0
  %v505 = vsel %vm155, %v474, 0
  %v507 = vsel %vm155, %v476, 0
  %v509 = vsel %vm155, %v478, 0
  %v511 = vsel %vm155, %v480, 0
  %v513 = vsel %vm155, %v482, 0
  %v515 = vsel %vm155, %v484, 0
  %v517 = vsel %vm155, %v486, 0
  %v519 = vsel %vm155, %v488, 0
  %v521 = vsel %vm155, %v490, 0
  %v523 = vsel %vm155, %v492, 0
  %525 = vmatprep.subr.mxu0 0.0
  %526 = vmatpush1.xpose.msra.mxu0 %v523
  %527 = vmatprep.subr.mxu0 0.0
  %528 = vmatpush1.xpose.msra.mxu0 %v521
  %529 = vmatprep.subr.mxu0 0.0
  %530 = vmatpush1.xpose.msra.mxu0 %v519
  %531 = vmatprep.subr.mxu0 0.0
  %532 = vmatpush1.xpose.msra.mxu0 %v517
  %533 = vmatprep.subr.mxu0 0.0
  %534 = vmatpush1.xpose.msra.mxu0 %v515
  %535 = vmatprep.subr.mxu0 0.0
  %536 = vmatpush1.xpose.msra.mxu0 %v513
  %537 = vmatprep.subr.mxu0 0.0
  %538 = vmatpush1.xpose.msra.mxu0 %v511
  %539 = vmatprep.subr.mxu0 0.0
  %540 = vmatpush1.xpose.msra.mxu0 %v509
  %541 = vmatprep.subr.mxu0 0.0
  %542 = vmatpush1.xpose.msra.mxu0 %v507
  %543 = vmatprep.subr.mxu0 0.0
  %544 = vmatpush1.xpose.msra.mxu0 %v505
  %545 = vmatprep.subr.mxu0 0.0
  %546 = vmatpush1.xpose.msra.mxu0 %v503
  %547 = vmatprep.subr.mxu0 0.0
  %548 = vmatpush1.xpose.msra.mxu0 %v501
  %549 = vmatprep.subr.mxu0 0.0
  %550 = vmatpush1.xpose.msra.mxu0 %v499
  %551 = vmatprep.subr.mxu0 0.0
  %552 = vmatpush1.xpose.msra.mxu0 %v497
  %553 = vmatprep.subr.mxu0 0.0
  %554 = vmatpush1.xpose.msra.mxu0 %v495
  %555 = vmatprep.subr.mxu0 0.0
  %556 = vmatpush1.xpose.msra.mxu0 %v493
  %557 = vmatprep.subr.mxu0 0.0
  %558 = vmatpush2.xpose.msra.mxu0 0.0
  %559 = vmatprep.subr.mxu0 0.0
  %560 = vmatpush2.xpose.msra.mxu0 0.0
  %561 = vmatprep.subr.mxu0 0.0
  %562 = vmatpush2.xpose.msra.mxu0 0.0
  %563 = vmatprep.subr.mxu0 0.0
  %564 = vmatpush2.xpose.msra.mxu0 0.0
  %565 = vmatprep.subr.mxu0 0.0
  %566 = vmatpush2.xpose.msra.mxu0 0.0
  %567 = vmatprep.subr.mxu0 0.0
  %568 = vmatpush2.xpose.msra.mxu0 0.0
  %569 = vmatprep.subr.mxu0 0.0
  %570 = vmatpush2.xpose.msra.mxu0 0.0
  %571 = vmatprep.subr.mxu0 0.0
  %572 = vmatpush2.xpose.msra.mxu0 0.0
  %573 = vmatprep.subr.mxu0 0.0
  %574 = vmatpush2.xpose.msra.mxu0 0.0
  %575 = vmatprep.subr.mxu0 0.0
  %576 = vmatpush2.xpose.msra.mxu0 0.0
  %577 = vmatprep.subr.mxu0 0.0
  %578 = vmatpush2.xpose.msra.mxu0 0.0
  %579 = vmatprep.subr.mxu0 0.0
  %580 = vmatpush2.xpose.msra.mxu0 0.0
  %581 = vmatprep.subr.mxu0 0.0
  %582 = vmatpush2.xpose.msra.mxu0 0.0
  %583 = vmatprep.subr.mxu0 0.0
  %584 = vmatpush2.xpose.msra.mxu0 0.0
  %585 = vmatprep.subr.mxu0 0.0
  %586 = vmatpush2.xpose.msra.mxu0 0.0
  %587 = vmatprep.subr.mxu0 0.0
  %588 = vmatpush2.xpose.msra.mxu0 0.0
  %589 = vmatprep.mubr.f32.mxu0 0.0
  %590 = vmatmul.mubr.f32.gmra.mxu0 %v157
  %v591 = vpop.f32.mrf.mxu0
  %v592 = vadd.f32 %v78, %v591
  %v593 = vpop.f32.mrf.mxu0
  %594 = vmatprep.mubr.f32.mxu0 0.0
  %595 = vmatmul.mubr.f32.gmra.mxu0 %v160
  %v596 = vpop.f32.mrf.mxu0
  %v597 = vadd.f32 %v83, %v596
  %v598 = vpop.f32.mrf.mxu0
  %599 = vmatprep.mubr.f32.mxu0 0.0
  %600 = vmatmul.mubr.f32.gmra.mxu0 %v163
  %v601 = vpop.f32.mrf.mxu0
  %v602 = vadd.f32 %v88, %v601
  %v603 = vpop.f32.mrf.mxu0
  %604 = vmatprep.mubr.f32.mxu0 0.0
  %605 = vmatmul.mubr.f32.gmra.mxu0 %v166
  %v606 = vpop.f32.mrf.mxu0
  %v607 = vadd.f32 %v93, %v606
  %v608 = vpop.f32.mrf.mxu0
  %609 = vmatprep.mubr.f32.mxu0 0.0
  %610 = vmatmul.mubr.f32.gmra.mxu0 %v169
  %v611 = vpop.f32.mrf.mxu0
  %v612 = vadd.f32 %v98, %v611
  %v613 = vpop.f32.mrf.mxu0
  %614 = vmatprep.mubr.f32.mxu0 0.0
  %615 = vmatmul.mubr.f32.gmra.mxu0 %v172
  %v616 = vpop.f32.mrf.mxu0
  %v617 = vadd.f32 %v103, %v616
  %v618 = vpop.f32.mrf.mxu0
  %619 = vmatprep.mubr.f32.mxu0 0.0
  %620 = vmatmul.mubr.f32.gmra.mxu0 %v175
  %v621 = vpop.f32.mrf.mxu0
  %v622 = vadd.f32 %v108, %v621
  %v623 = vpop.f32.mrf.mxu0
  %624 = vmatprep.mubr.f32.mxu0 0.0
  %625 = vmatmul.mubr.f32.gmra.mxu0 %v178
  %v626 = vpop.f32.mrf.mxu0
  %v627 = vadd.f32 %v113, %v626
  %v628 = vpop.f32.mrf.mxu0
  %629 = vmatprep.mubr.f32.mxu0 0.0
  %630 = vmatmul.mubr.f32.gmra.mxu0 %v181
  %v631 = vpop.f32.mrf.mxu0
  %v632 = vadd.f32 %v118, %v631
  %v633 = vpop.f32.mrf.mxu0
  %634 = vmatprep.mubr.f32.mxu0 0.0
  %635 = vmatmul.mubr.f32.gmra.mxu0 %v184
  %v636 = vpop.f32.mrf.mxu0
  %v637 = vadd.f32 %v123, %v636
  %v638 = vpop.f32.mrf.mxu0
  %639 = vmatprep.mubr.f32.mxu0 0.0
  %640 = vmatmul.mubr.f32.gmra.mxu0 %v187
  %v641 = vpop.f32.mrf.mxu0
  %v642 = vadd.f32 %v128, %v641
  %v643 = vpop.f32.mrf.mxu0
  %644 = vmatprep.mubr.f32.mxu0 0.0
  %645 = vmatmul.mubr.f32.gmra.mxu0 %v190
  %v646 = vpop.f32.mrf.mxu0
  %v647 = vadd.f32 %v133, %v646
  %v648 = vpop.f32.mrf.mxu0
  %649 = vmatprep.mubr.f32.mxu0 0.0
  %650 = vmatmul.mubr.f32.gmra.mxu0 %v193
  %v651 = vpop.f32.mrf.mxu0
  %v652 = vadd.f32 %v138, %v651
  %v653 = vpop.f32.mrf.mxu0
  %654 = vmatprep.mubr.f32.mxu0 0.0
  %655 = vmatmul.mubr.f32.gmra.mxu0 %v196
  %v656 = vpop.f32.mrf.mxu0
  %v657 = vadd.f32 %v143, %v656
  %v658 = vpop.f32.mrf.mxu0
  %659 = vmatprep.mubr.f32.mxu0 0.0
  %660 = vmatmul.mubr.f32.gmra.mxu0 %v199
  %v661 = vpop.f32.mrf.mxu0
  %v662 = vadd.f32 %v148, %v661
  %v663 = vpop.f32.mrf.mxu0
  %664 = vmatprep.mubr.f32.mxu0 0.0
  %665 = vmatmul.mubr.f32.gmra.mxu0 %v202
  %v666 = vpop.f32.mrf.mxu0
  %v667 = vadd.f32 %v153, %v666
  %v668 = vpop.f32.mrf.mxu0
  %669 = vdwg.mxu0
  %v670 = vmax.f32 %v592, 0.0
  %v671 = vmax.f32 %v597, 0.0
  %v672 = vmax.f32 %v602, 0.0
  %v673 = vmax.f32 %v607, 0.0
  %v674 = vmax.f32 %v612, 0.0
  %v675 = vmax.f32 %v617, 0.0
  %v676 = vmax.f32 %v622, 0.0
  %v677 = vmax.f32 %v627, 0.0
  %v678 = vmax.f32 %v632, 0.0
  %v679 = vmax.f32 %v637, 0.0
  %v680 = vmax.f32 %v642, 0.0
  %v681 = vmax.f32 %v647, 0.0
  %v682 = vmax.f32 %v652, 0.0
  %v683 = vmax.f32 %v657, 0.0
  %v684 = vmax.f32 %v662, 0.0
  %v685 = vmax.f32 %v667, 0.0
  %v686 = vld [vmem:[#allocation2] sm:$0xff]
  %v687 = vld [vmem:[#allocation2 + $0x8] sm:$0xff]
  %v688 = vld [vmem:[#allocation2 + $0x10] sm:$0xff]
  %v689 = vld [vmem:[#allocation2 + $0x18] sm:$0xff]
  %v690 = vld [vmem:[#allocation2 + $0x20] sm:$0xff]
  %v691 = vld [vmem:[#allocation2 + $0x28] sm:$0xff]
  %v692 = vld [vmem:[#allocation2 + $0x30] sm:$0xff]
  %v693 = vld [vmem:[#allocation2 + $0x38] sm:$0xff]
  %v694 = vld [vmem:[#allocation2 + $0x40] sm:$0xff]
  %v695 = vld [vmem:[#allocation2 + $0x48] sm:$0xff]
  %v696 = vld [vmem:[#allocation2 + $0x50] sm:$0xff]
  %v697 = vld [vmem:[#allocation2 + $0x58] sm:$0xff]
  %v698 = vld [vmem:[#allocation2 + $0x60] sm:$0xff]
  %v699 = vld [vmem:[#allocation2 + $0x68] sm:$0xff]
  %v700 = vld [vmem:[#allocation2 + $0x70] sm:$0xff]
  %v701 = vld [vmem:[#allocation2 + $0x78] sm:$0xff]
  %v702 = vadd.f32 %v686, %v670
  %v703 = vadd.f32 %v687, %v671
  %v704 = vadd.f32 %v688, %v672
  %v705 = vadd.f32 %v689, %v673
  %v706 = vadd.f32 %v690, %v674
  %v707 = vadd.f32 %v691, %v675
  %v708 = vadd.f32 %v692, %v676
  %v709 = vadd.f32 %v693, %v677
  %v710 = vadd.f32 %v694, %v678
  %v711 = vadd.f32 %v695, %v679
  %v712 = vadd.f32 %v696, %v680
  %v713 = vadd.f32 %v697, %v681
  %v714 = vadd.f32 %v698, %v682
  %v715 = vadd.f32 %v699, %v683
  %v716 = vadd.f32 %v700, %v684
  %v717 = vadd.f32 %v701, %v685
  %718 = vst [vmem:[#allocation2] sm:$0xff] %v702
  %719 = vst [vmem:[#allocation2 + $0x8] sm:$0xff] %v703
  %720 = vst [vmem:[#allocation2 + $0x10] sm:$0xff] %v704
  %721 = vst [vmem:[#allocation2 + $0x18] sm:$0xff] %v705
  %722 = vst [vmem:[#allocation2 + $0x20] sm:$0xff] %v706
  %723 = vst [vmem:[#allocation2 + $0x28] sm:$0xff] %v707
  %724 = vst [vmem:[#allocation2 + $0x30] sm:$0xff] %v708
  %725 = vst [vmem:[#allocation2 + $0x38] sm:$0xff] %v709
  %726 = vst [vmem:[#allocation2 + $0x40] sm:$0xff] %v710
  %727 = vst [vmem:[#allocation2 + $0x48] sm:$0xff] %v711
  %728 = vst [vmem:[#allocation2 + $0x50] sm:$0xff] %v712
  %729 = vst [vmem:[#allocation2 + $0x58] sm:$0xff] %v713
  %730 = vst [vmem:[#allocation2 + $0x60] sm:$0xff] %v714
  %731 = vst [vmem:[#allocation2 + $0x68] sm:$0xff] %v715
  %732 = vst [vmem:[#allocation2 + $0x70] sm:$0xff] %v716
  %733 = vst [vmem:[#allocation2 + $0x78] sm:$0xff] %v717
  %v734 = vld [vmem:[%s0] sm:$0xff]
  %v735 = vld [vmem:[%s0 + $0x8] sm:$0xff]
  %v736 = vld [vmem:[%s0 + $0x10] sm:$0xff]
  %v737 = vld [vmem:[%s0 + $0x18] sm:$0xff]
  %v738 = vld [vmem:[%s0 + $0x20] sm:$0xff]
  %v739 = vld [vmem:[%s0 + $0x28] sm:$0xff]
  %v740 = vld [vmem:[%s0 + $0x30] sm:$0xff]
  %v741 = vld [vmem:[%s0 + $0x38] sm:$0xff]
  %v742 = vld [vmem:[%s0 + $0x40] sm:$0xff]
  %v743 = vld [vmem:[%s0 + $0x48] sm:$0xff]
  %v744 = vld [vmem:[%s0 + $0x50] sm:$0xff]
  %v745 = vld [vmem:[%s0 + $0x58] sm:$0xff]
  %v746 = vld [vmem:[%s0 + $0x60] sm:$0xff]
  %v747 = vld [vmem:[%s0 + $0x68] sm:$0xff]
  %v748 = vld [vmem:[%s0 + $0x70] sm:$0xff]
  %v749 = vld [vmem:[%s0 + $0x78] sm:$0xff]
  %766 = vrot.lane.b32.xlu0 %v734, 120
  %v767 = vpop.permute.xlu0 %766
  %768 = vrot.lane.b32.xlu0 %v735, 120
  %v769 = vpop.permute.xlu0 %768
  %770 = vrot.lane.b32.xlu0 %v736, 120
  %v771 = vpop.permute.xlu0 %770
  %772 = vrot.lane.b32.xlu0 %v737, 120
  %v773 = vpop.permute.xlu0 %772
  %774 = vrot.lane.b32.xlu0 %v738, 120
  %v775 = vpop.permute.xlu0 %774
  %776 = vrot.lane.b32.xlu0 %v739, 120
  %v777 = vpop.permute.xlu0 %776
  %778 = vrot.lane.b32.xlu0 %v740, 120
  %v779 = vpop.permute.xlu0 %778
  %780 = vrot.lane.b32.xlu0 %v741, 120
  %v781 = vpop.permute.xlu0 %780
  %782 = vrot.lane.b32.xlu0 %v742, 120
  %v783 = vpop.permute.xlu0 %782
  %784 = vrot.lane.b32.xlu0 %v743, 120
  %v785 = vpop.permute.xlu0 %784
  %786 = vrot.lane.b32.xlu0 %v744, 120
  %v787 = vpop.permute.xlu0 %786
  %788 = vrot.lane.b32.xlu0 %v745, 120
  %v789 = vpop.permute.xlu0 %788
  %790 = vrot.lane.b32.xlu0 %v746, 120
  %v791 = vpop.permute.xlu0 %790
  %792 = vrot.lane.b32.xlu0 %v747, 120
  %v793 = vpop.permute.xlu0 %792
  %794 = vrot.lane.b32.xlu0 %v748, 120
  %v795 = vpop.permute.xlu0 %794
  %796 = vrot.lane.b32.xlu0 %v749, 120
  %v797 = vpop.permute.xlu0 %796
  %v798 = vsel %vm155, %v767, 0
  %v800 = vsel %vm155, %v769, 0
  %v802 = vsel %vm155, %v771, 0
  %v804 = vsel %vm155, %v773, 0
  %v806 = vsel %vm155, %v775, 0
  %v808 = vsel %vm155, %v777, 0
  %v810 = vsel %vm155, %v779, 0
  %v812 = vsel %vm155, %v781, 0
  %v814 = vsel %vm155, %v783, 0
  %v816 = vsel %vm155, %v785, 0
  %v818 = vsel %vm155, %v787, 0
  %v820 = vsel %vm155, %v789, 0
  %v822 = vsel %vm155, %v791, 0
  %v824 = vsel %vm155, %v793, 0
  %v826 = vsel %vm155, %v795, 0
  %v828 = vsel %vm155, %v797, 0
  %830 = vmatprep.subr.mxu0 0.0
  %831 = vmatpush1.xpose.msra.mxu0 %v828
  %832 = vmatprep.subr.mxu0 0.0
  %833 = vmatpush1.xpose.msra.mxu0 %v826
  %834 = vmatprep.subr.mxu0 0.0
  %835 = vmatpush1.xpose.msra.mxu0 %v824
  %836 = vmatprep.subr.mxu0 0.0
  %837 = vmatpush1.xpose.msra.mxu0 %v822
  %838 = vmatprep.subr.mxu0 0.0
  %839 = vmatpush1.xpose.msra.mxu0 %v820
  %840 = vmatprep.subr.mxu0 0.0
  %841 = vmatpush1.xpose.msra.mxu0 %v818
  %842 = vmatprep.subr.mxu0 0.0
  %843 = vmatpush1.xpose.msra.mxu0 %v816
  %844 = vmatprep.subr.mxu0 0.0
  %845 = vmatpush1.xpose.msra.mxu0 %v814
  %846 = vmatprep.subr.mxu0 0.0
  %847 = vmatpush1.xpose.msra.mxu0 %v812
  %848 = vmatprep.subr.mxu0 0.0
  %849 = vmatpush1.xpose.msra.mxu0 %v810
  %850 = vmatprep.subr.mxu0 0.0
  %851 = vmatpush1.xpose.msra.mxu0 %v808
  %852 = vmatprep.subr.mxu0 0.0
  %853 = vmatpush1.xpose.msra.mxu0 %v806
  %854 = vmatprep.subr.mxu0 0.0
  %855 = vmatpush1.xpose.msra.mxu0 %v804
  %856 = vmatprep.subr.mxu0 0.0
  %857 = vmatpush1.xpose.msra.mxu0 %v802
  %858 = vmatprep.subr.mxu0 0.0
  %859 = vmatpush1.xpose.msra.mxu0 %v800
  %860 = vmatprep.subr.mxu0 0.0
  %861 = vmatpush1.xpose.msra.mxu0 %v798
  %862 = vmatprep.subr.mxu0 0.0
  %863 = vmatpush2.xpose.msra.mxu0 0.0
  %864 = vmatprep.subr.mxu0 0.0
  %865 = vmatpush2.xpose.msra.mxu0 0.0
  %866 = vmatprep.subr.mxu0 0.0
  %867 = vmatpush2.xpose.msra.mxu0 0.0
  %868 = vmatprep.subr.mxu0 0.0
  %869 = vmatpush2.xpose.msra.mxu0 0.0
  %870 = vmatprep.subr.mxu0 0.0
  %871 = vmatpush2.xpose.msra.mxu0 0.0
  %872 = vmatprep.subr.mxu0 0.0
  %873 = vmatpush2.xpose.msra.mxu0 0.0
  %874 = vmatprep.subr.mxu0 0.0
  %875 = vmatpush2.xpose.msra.mxu0 0.0
  %876 = vmatprep.subr.mxu0 0.0
  %877 = vmatpush2.xpose.msra.mxu0 0.0
  %878 = vmatprep.subr.mxu0 0.0
  %879 = vmatpush2.xpose.msra.mxu0 0.0
  %880 = vmatprep.subr.mxu0 0.0
  %881 = vmatpush2.xpose.msra.mxu0 0.0
  %882 = vmatprep.subr.mxu0 0.0
  %883 = vmatpush2.xpose.msra.mxu0 0.0
  %884 = vmatprep.subr.mxu0 0.0
  %885 = vmatpush2.xpose.msra.mxu0 0.0
  %886 = vmatprep.subr.mxu0 0.0
  %887 = vmatpush2.xpose.msra.mxu0 0.0
  %888 = vmatprep.subr.mxu0 0.0
  %889 = vmatpush2.xpose.msra.mxu0 0.0
  %890 = vmatprep.subr.mxu0 0.0
  %891 = vmatpush2.xpose.msra.mxu0 0.0
  %892 = vmatprep.subr.mxu0 0.0
  %893 = vmatpush2.xpose.msra.mxu0 0.0
  %894 = vmatprep.mubr.f32.mxu0 0.0
  %895 = vmatmul.mubr.f32.gmra.mxu0 %v157
  %v896 = vpop.f32.mrf.mxu0
  %v897 = vadd.f32 %v78, %v896
  %v898 = vpop.f32.mrf.mxu0
  %899 = vmatprep.mubr.f32.mxu0 0.0
  %900 = vmatmul.mubr.f32.gmra.mxu0 %v160
  %v901 = vpop.f32.mrf.mxu0
  %v902 = vadd.f32 %v83, %v901
  %v903 = vpop.f32.mrf.mxu0
  %904 = vmatprep.mubr.f32.mxu0 0.0
  %905 = vmatmul.mubr.f32.gmra.mxu0 %v163
  %v906 = vpop.f32.mrf.mxu0
  %v907 = vadd.f32 %v88, %v906
  %v908 = vpop.f32.mrf.mxu0
  %909 = vmatprep.mubr.f32.mxu0 0.0
  %910 = vmatmul.mubr.f32.gmra.mxu0 %v166
  %v911 = vpop.f32.mrf.mxu0
  %v912 = vadd.f32 %v93, %v911
  %v913 = vpop.f32.mrf.mxu0
  %914 = vmatprep.mubr.f32.mxu0 0.0
  %915 = vmatmul.mubr.f32.gmra.mxu0 %v169
  %v916 = vpop.f32.mrf.mxu0
  %v917 = vadd.f32 %v98, %v916
  %v918 = vpop.f32.mrf.mxu0
  %919 = vmatprep.mubr.f32.mxu0 0.0
  %920 = vmatmul.mubr.f32.gmra.mxu0 %v172
  %v921 = vpop.f32.mrf.mxu0
  %v922 = vadd.f32 %v103, %v921
  %v923 = vpop.f32.mrf.mxu0
  %924 = vmatprep.mubr.f32.mxu0 0.0
  %925 = vmatmul.mubr.f32.gmra.mxu0 %v175
  %v926 = vpop.f32.mrf.mxu0
  %v927 = vadd.f32 %v108, %v926
  %v928 = vpop.f32.mrf.mxu0
  %929 = vmatprep.mubr.f32.mxu0 0.0
  %930 = vmatmul.mubr.f32.gmra.mxu0 %v178
  %v931 = vpop.f32.mrf.mxu0
  %v932 = vadd.f32 %v113, %v931
  %v933 = vpop.f32.mrf.mxu0
  %934 = vmatprep.mubr.f32.mxu0 0.0
  %935 = vmatmul.mubr.f32.gmra.mxu0 %v181
  %v936 = vpop.f32.mrf.mxu0
  %v937 = vadd.f32 %v118, %v936
  %v938 = vpop.f32.mrf.mxu0
  %939 = vmatprep.mubr.f32.mxu0 0.0
  %940 = vmatmul.mubr.f32.gmra.mxu0 %v184
  %v941 = vpop.f32.mrf.mxu0
  %v942 = vadd.f32 %v123, %v941
  %v943 = vpop.f32.mrf.mxu0
  %944 = vmatprep.mubr.f32.mxu0 0.0
  %945 = vmatmul.mubr.f32.gmra.mxu0 %v187
  %v946 = vpop.f32.mrf.mxu0
  %v947 = vadd.f32 %v128, %v946
  %v948 = vpop.f32.mrf.mxu0
  %949 = vmatprep.mubr.f32.mxu0 0.0
  %950 = vmatmul.mubr.f32.gmra.mxu0 %v190
  %v951 = vpop.f32.mrf.mxu0
  %v952 = vadd.f32 %v133, %v951
  %v953 = vpop.f32.mrf.mxu0
  %954 = vmatprep.mubr.f32.mxu0 0.0
  %955 = vmatmul.mubr.f32.gmra.mxu0 %v193
  %v956 = vpop.f32.mrf.mxu0
  %v957 = vadd.f32 %v138, %v956
  %v958 = vpop.f32.mrf.mxu0
  %959 = vmatprep.mubr.f32.mxu0 0.0
  %960 = vmatmul.mubr.f32.gmra.mxu0 %v196
  %v961 = vpop.f32.mrf.mxu0
  %v962 = vadd.f32 %v143, %v961
  %v963 = vpop.f32.mrf.mxu0
  %964 = vmatprep.mubr.f32.mxu0 0.0
  %965 = vmatmul.mubr.f32.gmra.mxu0 %v199
  %v966 = vpop.f32.mrf.mxu0
  %v967 = vadd.f32 %v148, %v966
  %v968 = vpop.f32.mrf.mxu0
  %969 = vmatprep.mubr.f32.mxu0 0.0
  %970 = vmatmul.mubr.f32.gmra.mxu0 %v202
  %v971 = vpop.f32.mrf.mxu0
  %v972 = vadd.f32 %v153, %v971
  %v973 = vpop.f32.mrf.mxu0
  %974 = vdwg.mxu0
  %v975 = vmax.f32 %v897, 0.0
  %v976 = vmax.f32 %v902, 0.0
  %v977 = vmax.f32 %v907, 0.0
  %v978 = vmax.f32 %v912, 0.0
  %v979 = vmax.f32 %v917, 0.0
  %v980 = vmax.f32 %v922, 0.0
  %v981 = vmax.f32 %v927, 0.0
  %v982 = vmax.f32 %v932, 0.0
  %v983 = vmax.f32 %v937, 0.0
  %v984 = vmax.f32 %v942, 0.0
  %v985 = vmax.f32 %v947, 0.0
  %v986 = vmax.f32 %v952, 0.0
  %v987 = vmax.f32 %v957, 0.0
  %v988 = vmax.f32 %v962, 0.0
  %v989 = vmax.f32 %v967, 0.0
  %v990 = vmax.f32 %v972, 0.0
  %v991 = vld [vmem:[#allocation2] sm:$0xff]
  %v992 = vld [vmem:[#allocation2 + $0x8] sm:$0xff]
  %v993 = vld [vmem:[#allocation2 + $0x10] sm:$0xff]
  %v994 = vld [vmem:[#allocation2 + $0x18] sm:$0xff]
  %v995 = vld [vmem:[#allocation2 + $0x20] sm:$0xff]
  %v996 = vld [vmem:[#allocation2 + $0x28] sm:$0xff]
  %v997 = vld [vmem:[#allocation2 + $0x30] sm:$0xff]
  %v998 = vld [vmem:[#allocation2 + $0x38] sm:$0xff]
  %v999 = vld [vmem:[#allocation2 + $0x40] sm:$0xff]
  %v1000 = vld [vmem:[#allocation2 + $0x48] sm:$0xff]
  %v1001 = vld [vmem:[#allocation2 + $0x50] sm:$0xff]
  %v1002 = vld [vmem:[#allocation2 + $0x58] sm:$0xff]
  %v1003 = vld [vmem:[#allocation2 + $0x60] sm:$0xff]
  %v1004 = vld [vmem:[#allocation2 + $0x68] sm:$0xff]
  %v1005 = vld [vmem:[#allocation2 + $0x70] sm:$0xff]
  %v1006 = vld [vmem:[#allocation2 + $0x78] sm:$0xff]
  %v1007 = vadd.f32 %v991, %v975
  %v1008 = vadd.f32 %v992, %v976
  %v1009 = vadd.f32 %v993, %v977
  %v1010 = vadd.f32 %v994, %v978
  %v1011 = vadd.f32 %v995, %v979
  %v1012 = vadd.f32 %v996, %v980
  %v1013 = vadd.f32 %v997, %v981
  %v1014 = vadd.f32 %v998, %v982
  %v1015 = vadd.f32 %v999, %v983
  %v1016 = vadd.f32 %v1000, %v984
  %v1017 = vadd.f32 %v1001, %v985
  %v1018 = vadd.f32 %v1002, %v986
  %v1019 = vadd.f32 %v1003, %v987
  %v1020 = vadd.f32 %v1004, %v988
  %v1021 = vadd.f32 %v1005, %v989
  %v1022 = vadd.f32 %v1006, %v990
  %1023 = vst [vmem:[#allocation2] sm:$0xff] %v1007
  %1024 = vst [vmem:[#allocation2 + $0x8] sm:$0xff] %v1008
  %1025 = vst [vmem:[#allocation2 + $0x10] sm:$0xff] %v1009
  %1026 = vst [vmem:[#allocation2 + $0x18] sm:$0xff] %v1010
  %1027 = vst [vmem:[#allocation2 + $0x20] sm:$0xff] %v1011
  %1028 = vst [vmem:[#allocation2 + $0x28] sm:$0xff] %v1012
  %1029 = vst [vmem:[#allocation2 + $0x30] sm:$0xff] %v1013
  %1030 = vst [vmem:[#allocation2 + $0x38] sm:$0xff] %v1014
  %1031 = vst [vmem:[#allocation2 + $0x40] sm:$0xff] %v1015
  %1032 = vst [vmem:[#allocation2 + $0x48] sm:$0xff] %v1016
  %1033 = vst [vmem:[#allocation2 + $0x50] sm:$0xff] %v1017
  %1034 = vst [vmem:[#allocation2 + $0x58] sm:$0xff] %v1018
  %1035 = vst [vmem:[#allocation2 + $0x60] sm:$0xff] %v1019
  %1036 = vst [vmem:[#allocation2 + $0x68] sm:$0xff] %v1020
  %1037 = vst [vmem:[#allocation2 + $0x70] sm:$0xff] %v1021
  %1038 = vst [vmem:[#allocation2 + $0x78] sm:$0xff] %v1022
  %v1039 = vld [vmem:[%s0] sm:$0xff]
  %v1040 = vld [vmem:[%s0 + $0x8] sm:$0xff]
  %v1041 = vld [vmem:[%s0 + $0x10] sm:$0xff]
  %v1042 = vld [vmem:[%s0 + $0x18] sm:$0xff]
  %v1043 = vld [vmem:[%s0 + $0x20] sm:$0xff]
  %v1044 = vld [vmem:[%s0 + $0x28] sm:$0xff]
  %v1045 = vld [vmem:[%s0 + $0x30] sm:$0xff]
  %v1046 = vld [vmem:[%s0 + $0x38] sm:$0xff]
  %v1047 = vld [vmem:[%s0 + $0x40] sm:$0xff]
  %v1048 = vld [vmem:[%s0 + $0x48] sm:$0xff]
  %v1049 = vld [vmem:[%s0 + $0x50] sm:$0xff]
  %v1050 = vld [vmem:[%s0 + $0x58] sm:$0xff]
  %v1051 = vld [vmem:[%s0 + $0x60] sm:$0xff]
  %v1052 = vld [vmem:[%s0 + $0x68] sm:$0xff]
  %v1053 = vld [vmem:[%s0 + $0x70] sm:$0xff]
  %v1054 = vld [vmem:[%s0 + $0x78] sm:$0xff]
  %1071 = vrot.lane.b32.xlu0 %v1039, 116
  %v1072 = vpop.permute.xlu0 %1071
  %1073 = vrot.lane.b32.xlu0 %v1040, 116
  %v1074 = vpop.permute.xlu0 %1073
  %1075 = vrot.lane.b32.xlu0 %v1041, 116
  %v1076 = vpop.permute.xlu0 %1075
  %1077 = vrot.lane.b32.xlu0 %v1042, 116
  %v1078 = vpop.permute.xlu0 %1077
  %1079 = vrot.lane.b32.xlu0 %v1043, 116
  %v1080 = vpop.permute.xlu0 %1079
  %1081 = vrot.lane.b32.xlu0 %v1044, 116
  %v1082 = vpop.permute.xlu0 %1081
  %1083 = vrot.lane.b32.xlu0 %v1045, 116
  %v1084 = vpop.permute.xlu0 %1083
  %1085 = vrot.lane.b32.xlu0 %v1046, 116
  %v1086 = vpop.permute.xlu0 %1085
  %1087 = vrot.lane.b32.xlu0 %v1047, 116
  %v1088 = vpop.permute.xlu0 %1087
  %1089 = vrot.lane.b32.xlu0 %v1048, 116
  %v1090 = vpop.permute.xlu0 %1089
  %1091 = vrot.lane.b32.xlu0 %v1049, 116
  %v1092 = vpop.permute.xlu0 %1091
  %1093 = vrot.lane.b32.xlu0 %v1050, 116
  %v1094 = vpop.permute.xlu0 %1093
  %1095 = vrot.lane.b32.xlu0 %v1051, 116
  %v1096 = vpop.permute.xlu0 %1095
  %1097 = vrot.lane.b32.xlu0 %v1052, 116
  %v1098 = vpop.permute.xlu0 %1097
  %1099 = vrot.lane.b32.xlu0 %v1053, 116
  %v1100 = vpop.permute.xlu0 %1099
  %1101 = vrot.lane.b32.xlu0 %v1054, 116
  %v1102 = vpop.permute.xlu0 %1101
  %v1103 = vsel %vm155, %v1072, 0
  %v1105 = vsel %vm155, %v1074, 0
  %v1107 = vsel %vm155, %v1076, 0
  %v1109 = vsel %vm155, %v1078, 0
  %v1111 = vsel %vm155, %v1080, 0
  %v1113 = vsel %vm155, %v1082, 0
  %v1115 = vsel %vm155, %v1084, 0
  %v1117 = vsel %vm155, %v1086, 0
  %v1119 = vsel %vm155, %v1088, 0
  %v1121 = vsel %vm155, %v1090, 0
  %v1123 = vsel %vm155, %v1092, 0
  %v1125 = vsel %vm155, %v1094, 0
  %v1127 = vsel %vm155, %v1096, 0
  %v1129 = vsel %vm155, %v1098, 0
  %v1131 = vsel %vm155, %v1100, 0
  %v1133 = vsel %vm155, %v1102, 0
  %1135 = vmatprep.subr.mxu0 0.0
  %1136 = vmatpush1.xpose.msra.mxu0 %v1133
  %1137 = vmatprep.subr.mxu0 0.0
  %1138 = vmatpush1.xpose.msra.mxu0 %v1131
  %1139 = vmatprep.subr.mxu0 0.0
  %1140 = vmatpush1.xpose.msra.mxu0 %v1129
  %1141 = vmatprep.subr.mxu0 0.0
  %1142 = vmatpush1.xpose.msra.mxu0 %v1127
  %1143 = vmatprep.subr.mxu0 0.0
  %1144 = vmatpush1.xpose.msra.mxu0 %v1125
  %1145 = vmatprep.subr.mxu0 0.0
  %1146 = vmatpush1.xpose.msra.mxu0 %v1123
  %1147 = vmatprep.subr.mxu0 0.0
  %1148 = vmatpush1.xpose.msra.mxu0 %v1121
  %1149 = vmatprep.subr.mxu0 0.0
  %1150 = vmatpush1.xpose.msra.mxu0 %v1119
  %1151 = vmatprep.subr.mxu0 0.0
  %1152 = vmatpush1.xpose.msra.mxu0 %v1117
  %1153 = vmatprep.subr.mxu0 0.0
  %1154 = vmatpush1.xpose.msra.mxu0 %v1115
  %1155 = vmatprep.subr.mxu0 0.0
  %1156 = vmatpush1.xpose.msra.mxu0 %v1113
  %1157 = vmatprep.subr.mxu0 0.0
  %1158 = vmatpush1.xpose.msra.mxu0 %v1111
  %1159 = vmatprep.subr.mxu0 0.0
  %1160 = vmatpush1.xpose.msra.mxu0 %v1109
  %1161 = vmatprep.subr.mxu0 0.0
  %1162 = vmatpush1.xpose.msra.mxu0 %v1107
  %1163 = vmatprep.subr.mxu0 0.0
  %1164 = vmatpush1.xpose.msra.mxu0 %v1105
  %1165 = vmatprep.subr.mxu0 0.0
  %1166 = vmatpush1.xpose.msra.mxu0 %v1103
  %1167 = vmatprep.subr.mxu0 0.0
  %1168 = vmatpush2.xpose.msra.mxu0 0.0
  %1169 = vmatprep.subr.mxu0 0.0
  %1170 = vmatpush2.xpose.msra.mxu0 0.0
  %1171 = vmatprep.subr.mxu0 0.0
  %1172 = vmatpush2.xpose.msra.mxu0 0.0
  %1173 = vmatprep.subr.mxu0 0.0
  %1174 = vmatpush2.xpose.msra.mxu0 0.0
  %1175 = vmatprep.subr.mxu0 0.0
  %1176 = vmatpush2.xpose.msra.mxu0 0.0
  %1177 = vmatprep.subr.mxu0 0.0
  %1178 = vmatpush2.xpose.msra.mxu0 0.0
  %1179 = vmatprep.subr.mxu0 0.0
  %1180 = vmatpush2.xpose.msra.mxu0 0.0
  %1181 = vmatprep.subr.mxu0 0.0
  %1182 = vmatpush2.xpose.msra.mxu0 0.0
  %1183 = vmatprep.subr.mxu0 0.0
  %1184 = vmatpush2.xpose.msra.mxu0 0.0
  %1185 = vmatprep.subr.mxu0 0.0
  %1186 = vmatpush2.xpose.msra.mxu0 0.0
  %1187 = vmatprep.subr.mxu0 0.0
  %1188 = vmatpush2.xpose.msra.mxu0 0.0
  %1189 = vmatprep.subr.mxu0 0.0
  %1190 = vmatpush2.xpose.msra.mxu0 0.0
  %1191 = vmatprep.subr.mxu0 0.0
  %1192 = vmatpush2.xpose.msra.mxu0 0.0
  %1193 = vmatprep.subr.mxu0 0.0
  %1194 = vmatpush2.xpose.msra.mxu0 0.0
  %1195 = vmatprep.subr.mxu0 0.0
  %1196 = vmatpush2.xpose.msra.mxu0 0.0
  %1197 = vmatprep.subr.mxu0 0.0
  %1198 = vmatpush2.xpose.msra.mxu0 0.0
  %1199 = vmatprep.mubr.f32.mxu0 0.0
  %1200 = vmatmul.mubr.f32.gmra.mxu0 %v157
  %v1201 = vpop.f32.mrf.mxu0
  %v1202 = vadd.f32 %v78, %v1201
  %v1203 = vpop.f32.mrf.mxu0
  %1204 = vmatprep.mubr.f32.mxu0 0.0
  %1205 = vmatmul.mubr.f32.gmra.mxu0 %v160
  %v1206 = vpop.f32.mrf.mxu0
  %v1207 = vadd.f32 %v83, %v1206
  %v1208 = vpop.f32.mrf.mxu0
  %1209 = vmatprep.mubr.f32.mxu0 0.0
  %1210 = vmatmul.mubr.f32.gmra.mxu0 %v163
  %v1211 = vpop.f32.mrf.mxu0
  %v1212 = vadd.f32 %v88, %v1211
  %v1213 = vpop.f32.mrf.mxu0
  %1214 = vmatprep.mubr.f32.mxu0 0.0
  %1215 = vmatmul.mubr.f32.gmra.mxu0 %v166
  %v1216 = vpop.f32.mrf.mxu0
  %v1217 = vadd.f32 %v93, %v1216
  %v1218 = vpop.f32.mrf.mxu0
  %1219 = vmatprep.mubr.f32.mxu0 0.0
  %1220 = vmatmul.mubr.f32.gmra.mxu0 %v169
  %v1221 = vpop.f32.mrf.mxu0
  %v1222 = vadd.f32 %v98, %v1221
  %v1223 = vpop.f32.mrf.mxu0
  %1224 = vmatprep.mubr.f32.mxu0 0.0
  %1225 = vmatmul.mubr.f32.gmra.mxu0 %v172
  %v1226 = vpop.f32.mrf.mxu0
  %v1227 = vadd.f32 %v103, %v1226
  %v1228 = vpop.f32.mrf.mxu0
  %1229 = vmatprep.mubr.f32.mxu0 0.0
  %1230 = vmatmul.mubr.f32.gmra.mxu0 %v175
  %v1231 = vpop.f32.mrf.mxu0
  %v1232 = vadd.f32 %v108, %v1231
  %v1233 = vpop.f32.mrf.mxu0
  %1234 = vmatprep.mubr.f32.mxu0 0.0
  %1235 = vmatmul.mubr.f32.gmra.mxu0 %v178
  %v1236 = vpop.f32.mrf.mxu0
  %v1237 = vadd.f32 %v113, %v1236
  %v1238 = vpop.f32.mrf.mxu0
  %1239 = vmatprep.mubr.f32.mxu0 0.0
  %1240 = vmatmul.mubr.f32.gmra.mxu0 %v181
  %v1241 = vpop.f32.mrf.mxu0
  %v1242 = vadd.f32 %v118, %v1241
  %v1243 = vpop.f32.mrf.mxu0
  %1244 = vmatprep.mubr.f32.mxu0 0.0
  %1245 = vmatmul.mubr.f32.gmra.mxu0 %v184
  %v1246 = vpop.f32.mrf.mxu0
  %v1247 = vadd.f32 %v123, %v1246
  %v1248 = vpop.f32.mrf.mxu0
  %1249 = vmatprep.mubr.f32.mxu0 0.0
  %1250 = vmatmul.mubr.f32.gmra.mxu0 %v187
  %v1251 = vpop.f32.mrf.mxu0
  %v1252 = vadd.f32 %v128, %v1251
  %v1253 = vpop.f32.mrf.mxu0
  %1254 = vmatprep.mubr.f32.mxu0 0.0
  %1255 = vmatmul.mubr.f32.gmra.mxu0 %v190
  %v1256 = vpop.f32.mrf.mxu0
  %v1257 = vadd.f32 %v133, %v1256
  %v1258 = vpop.f32.mrf.mxu0
  %1259 = vmatprep.mubr.f32.mxu0 0.0
  %1260 = vmatmul.mubr.f32.gmra.mxu0 %v193
  %v1261 = vpop.f32.mrf.mxu0
  %v1262 = vadd.f32 %v138, %v1261
  %v1263 = vpop.f32.mrf.mxu0
  %1264 = vmatprep.mubr.f32.mxu0 0.0
  %1265 = vmatmul.mubr.f32.gmra.mxu0 %v196
  %v1266 = vpop.f32.mrf.mxu0
  %v1267 = vadd.f32 %v143, %v1266
  %v1268 = vpop.f32.mrf.mxu0
  %1269 = vmatprep.mubr.f32.mxu0 0.0
  %1270 = vmatmul.mubr.f32.gmra.mxu0 %v199
  %v1271 = vpop.f32.mrf.mxu0
  %v1272 = vadd.f32 %v148, %v1271
  %v1273 = vpop.f32.mrf.mxu0
  %1274 = vmatprep.mubr.f32.mxu0 0.0
  %1275 = vmatmul.mubr.f32.gmra.mxu0 %v202
  %v1276 = vpop.f32.mrf.mxu0
  %v1277 = vadd.f32 %v153, %v1276
  %v1278 = vpop.f32.mrf.mxu0
  %1279 = vdwg.mxu0
  %v1280 = vmax.f32 %v1202, 0.0
  %v1281 = vmax.f32 %v1207, 0.0
  %v1282 = vmax.f32 %v1212, 0.0
  %v1283 = vmax.f32 %v1217, 0.0
  %v1284 = vmax.f32 %v1222, 0.0
  %v1285 = vmax.f32 %v1227, 0.0
  %v1286 = vmax.f32 %v1232, 0.0
  %v1287 = vmax.f32 %v1237, 0.0
  %v1288 = vmax.f32 %v1242, 0.0
  %v1289 = vmax.f32 %v1247, 0.0
  %v1290 = vmax.f32 %v1252, 0.0
  %v1291 = vmax.f32 %v1257, 0.0
  %v1292 = vmax.f32 %v1262, 0.0
  %v1293 = vmax.f32 %v1267, 0.0
  %v1294 = vmax.f32 %v1272, 0.0
  %v1295 = vmax.f32 %v1277, 0.0
  %v1296 = vld [vmem:[#allocation2] sm:$0xff]
  %v1297 = vld [vmem:[#allocation2 + $0x8] sm:$0xff]
  %v1298 = vld [vmem:[#allocation2 + $0x10] sm:$0xff]
  %v1299 = vld [vmem:[#allocation2 + $0x18] sm:$0xff]
  %v1300 = vld [vmem:[#allocation2 + $0x20] sm:$0xff]
  %v1301 = vld [vmem:[#allocation2 + $0x28] sm:$0xff]
  %v1302 = vld [vmem:[#allocation2 + $0x30] sm:$0xff]
  %v1303 = vld [vmem:[#allocation2 + $0x38] sm:$0xff]
  %v1304 = vld [vmem:[#allocation2 + $0x40] sm:$0xff]
  %v1305 = vld [vmem:[#allocation2 + $0x48] sm:$0xff]
  %v1306 = vld [vmem:[#allocation2 + $0x50] sm:$0xff]
  %v1307 = vld [vmem:[#allocation2 + $0x58] sm:$0xff]
  %v1308 = vld [vmem:[#allocation2 + $0x60] sm:$0xff]
  %v1309 = vld [vmem:[#allocation2 + $0x68] sm:$0xff]
  %v1310 = vld [vmem:[#allocation2 + $0x70] sm:$0xff]
  %v1311 = vld [vmem:[#allocation2 + $0x78] sm:$0xff]
  %v1312 = vadd.f32 %v1296, %v1280
  %v1313 = vadd.f32 %v1297, %v1281
  %v1314 = vadd.f32 %v1298, %v1282
  %v1315 = vadd.f32 %v1299, %v1283
  %v1316 = vadd.f32 %v1300, %v1284
  %v1317 = vadd.f32 %v1301, %v1285
  %v1318 = vadd.f32 %v1302, %v1286
  %v1319 = vadd.f32 %v1303, %v1287
  %v1320 = vadd.f32 %v1304, %v1288
  %v1321 = vadd.f32 %v1305, %v1289
  %v1322 = vadd.f32 %v1306, %v1290
  %v1323 = vadd.f32 %v1307, %v1291
  %v1324 = vadd.f32 %v1308, %v1292
  %v1325 = vadd.f32 %v1309, %v1293
  %v1326 = vadd.f32 %v1310, %v1294
  %v1327 = vadd.f32 %v1311, %v1295
  %1328 = vst [vmem:[#allocation2] sm:$0xff] %v1312
  %1329 = vst [vmem:[#allocation2 + $0x8] sm:$0xff] %v1313
  %1330 = vst [vmem:[#allocation2 + $0x10] sm:$0xff] %v1314
  %1331 = vst [vmem:[#allocation2 + $0x18] sm:$0xff] %v1315
  %1332 = vst [vmem:[#allocation2 + $0x20] sm:$0xff] %v1316
  %1333 = vst [vmem:[#allocation2 + $0x28] sm:$0xff] %v1317
  %1334 = vst [vmem:[#allocation2 + $0x30] sm:$0xff] %v1318
  %1335 = vst [vmem:[#allocation2 + $0x38] sm:$0xff] %v1319
  %1336 = vst [vmem:[#allocation2 + $0x40] sm:$0xff] %v1320
  %1337 = vst [vmem:[#allocation2 + $0x48] sm:$0xff] %v1321
  %1338 = vst [vmem:[#allocation2 + $0x50] sm:$0xff] %v1322
  %1339 = vst [vmem:[#allocation2 + $0x58] sm:$0xff] %v1323
  %1340 = vst [vmem:[#allocation2 + $0x60] sm:$0xff] %v1324
  %1341 = vst [vmem:[#allocation2 + $0x68] sm:$0xff] %v1325
  %1342 = vst [vmem:[#allocation2 + $0x70] sm:$0xff] %v1326
  %1343 = vst [vmem:[#allocation2 + $0x78] sm:$0xff] %v1327
  %v1344 = vld [vmem:[%s0] sm:$0xff]
  %v1345 = vld [vmem:[%s0 + $0x8] sm:$0xff]
  %v1346 = vld [vmem:[%s0 + $0x10] sm:$0xff]
  %v1347 = vld [vmem:[%s0 + $0x18] sm:$0xff]
  %v1348 = vld [vmem:[%s0 + $0x20] sm:$0xff]
  %v1349 = vld [vmem:[%s0 + $0x28] sm:$0xff]
  %v1350 = vld [vmem:[%s0 + $0x30] sm:$0xff]
  %v1351 = vld [vmem:[%s0 + $0x38] sm:$0xff]
  %v1352 = vld [vmem:[%s0 + $0x40] sm:$0xff]
  %v1353 = vld [vmem:[%s0 + $0x48] sm:$0xff]
  %v1354 = vld [vmem:[%s0 + $0x50] sm:$0xff]
  %v1355 = vld [vmem:[%s0 + $0x58] sm:$0xff]
  %v1356 = vld [vmem:[%s0 + $0x60] sm:$0xff]
  %v1357 = vld [vmem:[%s0 + $0x68] sm:$0xff]
  %v1358 = vld [vmem:[%s0 + $0x70] sm:$0xff]
  %v1359 = vld [vmem:[%s0 + $0x78] sm:$0xff]
  %1376 = vrot.lane.b32.xlu0 %v1344, 112
  %v1377 = vpop.permute.xlu0 %1376
  %1378 = vrot.lane.b32.xlu0 %v1345, 112
  %v1379 = vpop.permute.xlu0 %1378
  %1380 = vrot.lane.b32.xlu0 %v1346, 112
  %v1381 = vpop.permute.xlu0 %1380
  %1382 = vrot.lane.b32.xlu0 %v1347, 112
  %v1383 = vpop.permute.xlu0 %1382
  %1384 = vrot.lane.b32.xlu0 %v1348, 112
  %v1385 = vpop.permute.xlu0 %1384
  %1386 = vrot.lane.b32.xlu0 %v1349, 112
  %v1387 = vpop.permute.xlu0 %1386
  %1388 = vrot.lane.b32.xlu0 %v1350, 112
  %v1389 = vpop.permute.xlu0 %1388
  %1390 = vrot.lane.b32.xlu0 %v1351, 112
  %v1391 = vpop.permute.xlu0 %1390
  %1392 = vrot.lane.b32.xlu0 %v1352, 112
  %v1393 = vpop.permute.xlu0 %1392
  %1394 = vrot.lane.b32.xlu0 %v1353, 112
  %v1395 = vpop.permute.xlu0 %1394
  %1396 = vrot.lane.b32.xlu0 %v1354, 112
  %v1397 = vpop.permute.xlu0 %1396
  %1398 = vrot.lane.b32.xlu0 %v1355, 112
  %v1399 = vpop.permute.xlu0 %1398
  %1400 = vrot.lane.b32.xlu0 %v1356, 112
  %v1401 = vpop.permute.xlu0 %1400
  %1402 = vrot.lane.b32.xlu0 %v1357, 112
  %v1403 = vpop.permute.xlu0 %1402
  %1404 = vrot.lane.b32.xlu0 %v1358, 112
  %v1405 = vpop.permute.xlu0 %1404
  %1406 = vrot.lane.b32.xlu0 %v1359, 112
  %v1407 = vpop.permute.xlu0 %1406
  %v1408 = vsel %vm155, %v1377, 0
  %v1410 = vsel %vm155, %v1379, 0
  %v1412 = vsel %vm155, %v1381, 0
  %v1414 = vsel %vm155, %v1383, 0
  %v1416 = vsel %vm155, %v1385, 0
  %v1418 = vsel %vm155, %v1387, 0
  %v1420 = vsel %vm155, %v1389, 0
  %v1422 = vsel %vm155, %v1391, 0
  %v1424 = vsel %vm155, %v1393, 0
  %v1426 = vsel %vm155, %v1395, 0
  %v1428 = vsel %vm155, %v1397, 0
  %v1430 = vsel %vm155, %v1399, 0
  %v1432 = vsel %vm155, %v1401, 0
  %v1434 = vsel %vm155, %v1403, 0
  %v1436 = vsel %vm155, %v1405, 0
  %v1438 = vsel %vm155, %v1407, 0
  %1440 = vmatprep.subr.mxu0 0.0
  %1441 = vmatpush1.xpose.msra.mxu0 %v1438
  %1442 = vmatprep.subr.mxu0 0.0
  %1443 = vmatpush1.xpose.msra.mxu0 %v1436
  %1444 = vmatprep.subr.mxu0 0.0
  %1445 = vmatpush1.xpose.msra.mxu0 %v1434
  %1446 = vmatprep.subr.mxu0 0.0
  %1447 = vmatpush1.xpose.msra.mxu0 %v1432
  %1448 = vmatprep.subr.mxu0 0.0
  %1449 = vmatpush1.xpose.msra.mxu0 %v1430
  %1450 = vmatprep.subr.mxu0 0.0
  %1451 = vmatpush1.xpose.msra.mxu0 %v1428
  %1452 = vmatprep.subr.mxu0 0.0
  %1453 = vmatpush1.xpose.msra.mxu0 %v1426
  %1454 = vmatprep.subr.mxu0 0.0
  %1455 = vmatpush1.xpose.msra.mxu0 %v1424
  %1456 = vmatprep.subr.mxu0 0.0
  %1457 = vmatpush1.xpose.msra.mxu0 %v1422
  %1458 = vmatprep.subr.mxu0 0.0
  %1459 = vmatpush1.xpose.msra.mxu0 %v1420
  %1460 = vmatprep.subr.mxu0 0.0
  %1461 = vmatpush1.xpose.msra.mxu0 %v1418
  %1462 = vmatprep.subr.mxu0 0.0
  %1463 = vmatpush1.xpose.msra.mxu0 %v1416
  %1464 = vmatprep.subr.mxu0 0.0
  %1465 = vmatpush1.xpose.msra.mxu0 %v1414
  %1466 = vmatprep.subr.mxu0 0.0
  %1467 = vmatpush1.xpose.msra.mxu0 %v1412
  %1468 = vmatprep.subr.mxu0 0.0
  %1469 = vmatpush1.xpose.msra.mxu0 %v1410
  %1470 = vmatprep.subr.mxu0 0.0
  %1471 = vmatpush1.xpose.msra.mxu0 %v1408
  %1472 = vmatprep.subr.mxu0 0.0
  %1473 = vmatpush2.xpose.msra.mxu0 0.0
  %1474 = vmatprep.subr.mxu0 0.0
  %1475 = vmatpush2.xpose.msra.mxu0 0.0
  %1476 = vmatprep.subr.mxu0 0.0
  %1477 = vmatpush2.xpose.msra.mxu0 0.0
  %1478 = vmatprep.subr.mxu0 0.0
  %1479 = vmatpush2.xpose.msra.mxu0 0.0
  %1480 = vmatprep.subr.mxu0 0.0
  %1481 = vmatpush2.xpose.msra.mxu0 0.0
  %1482 = vmatprep.subr.mxu0 0.0
  %1483 = vmatpush2.xpose.msra.mxu0 0.0
  %1484 = vmatprep.subr.mxu0 0.0
  %1485 = vmatpush2.xpose.msra.mxu0 0.0
  %1486 = vmatprep.subr.mxu0 0.0
  %1487 = vmatpush2.xpose.msra.mxu0 0.0
  %1488 = vmatprep.subr.mxu0 0.0
  %1489 = vmatpush2.xpose.msra.mxu0 0.0
  %1490 = vmatprep.subr.mxu0 0.0
  %1491 = vmatpush2.xpose.msra.mxu0 0.0
  %1492 = vmatprep.subr.mxu0 0.0
  %1493 = vmatpush2.xpose.msra.mxu0 0.0
  %1494 = vmatprep.subr.mxu0 0.0
  %1495 = vmatpush2.xpose.msra.mxu0 0.0
  %1496 = vmatprep.subr.mxu0 0.0
  %1497 = vmatpush2.xpose.msra.mxu0 0.0
  %1498 = vmatprep.subr.mxu0 0.0
  %1499 = vmatpush2.xpose.msra.mxu0 0.0
  %1500 = vmatprep.subr.mxu0 0.0
  %1501 = vmatpush2.xpose.msra.mxu0 0.0
  %1502 = vmatprep.subr.mxu0 0.0
  %1503 = vmatpush2.xpose.msra.mxu0 0.0
  %1504 = vmatprep.mubr.f32.mxu0 0.0
  %1505 = vmatmul.mubr.f32.gmra.mxu0 %v157
  %v1506 = vpop.f32.mrf.mxu0
  %v1507 = vadd.f32 %v78, %v1506
  %v1508 = vpop.f32.mrf.mxu0
  %1509 = vmatprep.mubr.f32.mxu0 0.0
  %1510 = vmatmul.mubr.f32.gmra.mxu0 %v160
  %v1511 = vpop.f32.mrf.mxu0
  %v1512 = vadd.f32 %v83, %v1511
  %v1513 = vpop.f32.mrf.mxu0
  %1514 = vmatprep.mubr.f32.mxu0 0.0
  %1515 = vmatmul.mubr.f32.gmra.mxu0 %v163
  %v1516 = vpop.f32.mrf.mxu0
  %v1517 = vadd.f32 %v88, %v1516
  %v1518 = vpop.f32.mrf.mxu0
  %1519 = vmatprep.mubr.f32.mxu0 0.0
  %1520 = vmatmul.mubr.f32.gmra.mxu0 %v166
  %v1521 = vpop.f32.mrf.mxu0
  %v1522 = vadd.f32 %v93, %v1521
  %v1523 = vpop.f32.mrf.mxu0
  %1524 = vmatprep.mubr.f32.mxu0 0.0
  %1525 = vmatmul.mubr.f32.gmra.mxu0 %v169
  %v1526 = vpop.f32.mrf.mxu0
  %v1527 = vadd.f32 %v98, %v1526
  %v1528 = vpop.f32.mrf.mxu0
  %1529 = vmatprep.mubr.f32.mxu0 0.0
  %1530 = vmatmul.mubr.f32.gmra.mxu0 %v172
  %v1531 = vpop.f32.mrf.mxu0
  %v1532 = vadd.f32 %v103, %v1531
  %v1533 = vpop.f32.mrf.mxu0
  %1534 = vmatprep.mubr.f32.mxu0 0.0
  %1535 = vmatmul.mubr.f32.gmra.mxu0 %v175
  %v1536 = vpop.f32.mrf.mxu0
  %v1537 = vadd.f32 %v108, %v1536
  %v1538 = vpop.f32.mrf.mxu0
  %1539 = vmatprep.mubr.f32.mxu0 0.0
  %1540 = vmatmul.mubr.f32.gmra.mxu0 %v178
  %v1541 = vpop.f32.mrf.mxu0
  %v1542 = vadd.f32 %v113, %v1541
  %v1543 = vpop.f32.mrf.mxu0
  %1544 = vmatprep.mubr.f32.mxu0 0.0
  %1545 = vmatmul.mubr.f32.gmra.mxu0 %v181
  %v1546 = vpop.f32.mrf.mxu0
  %v1547 = vadd.f32 %v118, %v1546
  %v1548 = vpop.f32.mrf.mxu0
  %1549 = vmatprep.mubr.f32.mxu0 0.0
  %1550 = vmatmul.mubr.f32.gmra.mxu0 %v184
  %v1551 = vpop.f32.mrf.mxu0
  %v1552 = vadd.f32 %v123, %v1551
  %v1553 = vpop.f32.mrf.mxu0
  %1554 = vmatprep.mubr.f32.mxu0 0.0
  %1555 = vmatmul.mubr.f32.gmra.mxu0 %v187
  %v1556 = vpop.f32.mrf.mxu0
  %v1557 = vadd.f32 %v128, %v1556
  %v1558 = vpop.f32.mrf.mxu0
  %1559 = vmatprep.mubr.f32.mxu0 0.0
  %1560 = vmatmul.mubr.f32.gmra.mxu0 %v190
  %v1561 = vpop.f32.mrf.mxu0
  %v1562 = vadd.f32 %v133, %v1561
  %v1563 = vpop.f32.mrf.mxu0
  %1564 = vmatprep.mubr.f32.mxu0 0.0
  %1565 = vmatmul.mubr.f32.gmra.mxu0 %v193
  %v1566 = vpop.f32.mrf.mxu0
  %v1567 = vadd.f32 %v138, %v1566
  %v1568 = vpop.f32.mrf.mxu0
  %1569 = vmatprep.mubr.f32.mxu0 0.0
  %1570 = vmatmul.mubr.f32.gmra.mxu0 %v196
  %v1571 = vpop.f32.mrf.mxu0
  %v1572 = vadd.f32 %v143, %v1571
  %v1573 = vpop.f32.mrf.mxu0
  %1574 = vmatprep.mubr.f32.mxu0 0.0
  %1575 = vmatmul.mubr.f32.gmra.mxu0 %v199
  %v1576 = vpop.f32.mrf.mxu0
  %v1577 = vadd.f32 %v148, %v1576
  %v1578 = vpop.f32.mrf.mxu0
  %1579 = vmatprep.mubr.f32.mxu0 0.0
  %1580 = vmatmul.mubr.f32.gmra.mxu0 %v202
  %v1581 = vpop.f32.mrf.mxu0
  %v1582 = vadd.f32 %v153, %v1581
  %v1583 = vpop.f32.mrf.mxu0
  %1584 = vdwg.mxu0
  %v1585 = vmax.f32 %v1507, 0.0
  %v1586 = vmax.f32 %v1512, 0.0
  %v1587 = vmax.f32 %v1517, 0.0
  %v1588 = vmax.f32 %v1522, 0.0
  %v1589 = vmax.f32 %v1527, 0.0
  %v1590 = vmax.f32 %v1532, 0.0
  %v1591 = vmax.f32 %v1537, 0.0
  %v1592 = vmax.f32 %v1542, 0.0
  %v1593 = vmax.f32 %v1547, 0.0
  %v1594 = vmax.f32 %v1552, 0.0
  %v1595 = vmax.f32 %v1557, 0.0
  %v1596 = vmax.f32 %v1562, 0.0
  %v1597 = vmax.f32 %v1567, 0.0
  %v1598 = vmax.f32 %v1572, 0.0
  %v1599 = vmax.f32 %v1577, 0.0
  %v1600 = vmax.f32 %v1582, 0.0
  %v1601 = vld [vmem:[#allocation2] sm:$0xff]
  %v1602 = vld [vmem:[#allocation2 + $0x8] sm:$0xff]
  %v1603 = vld [vmem:[#allocation2 + $0x10] sm:$0xff]
  %v1604 = vld [vmem:[#allocation2 + $0x18] sm:$0xff]
  %v1605 = vld [vmem:[#allocation2 + $0x20] sm:$0xff]
  %v1606 = vld [vmem:[#allocation2 + $0x28] sm:$0xff]
  %v1607 = vld [vmem:[#allocation2 + $0x30] sm:$0xff]
  %v1608 = vld [vmem:[#allocation2 + $0x38] sm:$0xff]
  %v1609 = vld [vmem:[#allocation2 + $0x40] sm:$0xff]
  %v1610 = vld [vmem:[#allocation2 + $0x48] sm:$0xff]
  %v1611 = vld [vmem:[#allocation2 + $0x50] sm:$0xff]
  %v1612 = vld [vmem:[#allocation2 + $0x58] sm:$0xff]
  %v1613 = vld [vmem:[#allocation2 + $0x60] sm:$0xff]
  %v1614 = vld [vmem:[#allocation2 + $0x68] sm:$0xff]
  %v1615 = vld [vmem:[#allocation2 + $0x70] sm:$0xff]
  %v1616 = vld [vmem:[#allocation2 + $0x78] sm:$0xff]
  %v1617 = vadd.f32 %v1601, %v1585
  %v1618 = vadd.f32 %v1602, %v1586
  %v1619 = vadd.f32 %v1603, %v1587
  %v1620 = vadd.f32 %v1604, %v1588
  %v1621 = vadd.f32 %v1605, %v1589
  %v1622 = vadd.f32 %v1606, %v1590
  %v1623 = vadd.f32 %v1607, %v1591
  %v1624 = vadd.f32 %v1608, %v1592
  %v1625 = vadd.f32 %v1609, %v1593
  %v1626 = vadd.f32 %v1610, %v1594
  %v1627 = vadd.f32 %v1611, %v1595
  %v1628 = vadd.f32 %v1612, %v1596
  %v1629 = vadd.f32 %v1613, %v1597
  %v1630 = vadd.f32 %v1614, %v1598
  %v1631 = vadd.f32 %v1615, %v1599
  %v1632 = vadd.f32 %v1616, %v1600
  %1633 = vst [vmem:[#allocation2] sm:$0xff] %v1617
  %1634 = vst [vmem:[#allocation2 + $0x8] sm:$0xff] %v1618
  %1635 = vst [vmem:[#allocation2 + $0x10] sm:$0xff] %v1619
  %1636 = vst [vmem:[#allocation2 + $0x18] sm:$0xff] %v1620
  %1637 = vst [vmem:[#allocation2 + $0x20] sm:$0xff] %v1621
  %1638 = vst [vmem:[#allocation2 + $0x28] sm:$0xff] %v1622
  %1639 = vst [vmem:[#allocation2 + $0x30] sm:$0xff] %v1623
  %1640 = vst [vmem:[#allocation2 + $0x38] sm:$0xff] %v1624
  %1641 = vst [vmem:[#allocation2 + $0x40] sm:$0xff] %v1625
  %1642 = vst [vmem:[#allocation2 + $0x48] sm:$0xff] %v1626
  %1643 = vst [vmem:[#allocation2 + $0x50] sm:$0xff] %v1627
  %1644 = vst [vmem:[#allocation2 + $0x58] sm:$0xff] %v1628
  %1645 = vst [vmem:[#allocation2 + $0x60] sm:$0xff] %v1629
  %1646 = vst [vmem:[#allocation2 + $0x68] sm:$0xff] %v1630
  %1647 = vst [vmem:[#allocation2 + $0x70] sm:$0xff] %v1631
  %1648 = vst [vmem:[#allocation2 + $0x78] sm:$0xff] %v1632
  %v1649 = vld [vmem:[%s0] sm:$0xff]
  %v1650 = vld [vmem:[%s0 + $0x8] sm:$0xff]
  %v1651 = vld [vmem:[%s0 + $0x10] sm:$0xff]
  %v1652 = vld [vmem:[%s0 + $0x18] sm:$0xff]
  %v1653 = vld [vmem:[%s0 + $0x20] sm:$0xff]
  %v1654 = vld [vmem:[%s0 + $0x28] sm:$0xff]
  %v1655 = vld [vmem:[%s0 + $0x30] sm:$0xff]
  %v1656 = vld [vmem:[%s0 + $0x38] sm:$0xff]
  %v1657 = vld [vmem:[%s0 + $0x40] sm:$0xff]
  %v1658 = vld [vmem:[%s0 + $0x48] sm:$0xff]
  %v1659 = vld [vmem:[%s0 + $0x50] sm:$0xff]
  %v1660 = vld [vmem:[%s0 + $0x58] sm:$0xff]
  %v1661 = vld [vmem:[%s0 + $0x60] sm:$0xff]
  %v1662 = vld [vmem:[%s0 + $0x68] sm:$0xff]
  %v1663 = vld [vmem:[%s0 + $0x70] sm:$0xff]
  %v1664 = vld [vmem:[%s0 + $0x78] sm:$0xff]
  %1681 = vrot.lane.b32.xlu0 %v1649, 108
  %v1682 = vpop.permute.xlu0 %1681
  %1683 = vrot.lane.b32.xlu0 %v1650, 108
  %v1684 = vpop.permute.xlu0 %1683
  %1685 = vrot.lane.b32.xlu0 %v1651, 108
  %v1686 = vpop.permute.xlu0 %1685
  %1687 = vrot.lane.b32.xlu0 %v1652, 108
  %v1688 = vpop.permute.xlu0 %1687
  %1689 = vrot.lane.b32.xlu0 %v1653, 108
  %v1690 = vpop.permute.xlu0 %1689
  %1691 = vrot.lane.b32.xlu0 %v1654, 108
  %v1692 = vpop.permute.xlu0 %1691
  %1693 = vrot.lane.b32.xlu0 %v1655, 108
  %v1694 = vpop.permute.xlu0 %1693
  %1695 = vrot.lane.b32.xlu0 %v1656, 108
  %v1696 = vpop.permute.xlu0 %1695
  %1697 = vrot.lane.b32.xlu0 %v1657, 108
  %v1698 = vpop.permute.xlu0 %1697
  %1699 = vrot.lane.b32.xlu0 %v1658, 108
  %v1700 = vpop.permute.xlu0 %1699
  %1701 = vrot.lane.b32.xlu0 %v1659, 108
  %v1702 = vpop.permute.xlu0 %1701
  %1703 = vrot.lane.b32.xlu0 %v1660, 108
  %v1704 = vpop.permute.xlu0 %1703
  %1705 = vrot.lane.b32.xlu0 %v1661, 108
  %v1706 = vpop.permute.xlu0 %1705
  %1707 = vrot.lane.b32.xlu0 %v1662, 108
  %v1708 = vpop.permute.xlu0 %1707
  %1709 = vrot.lane.b32.xlu0 %v1663, 108
  %v1710 = vpop.permute.xlu0 %1709
  %1711 = vrot.lane.b32.xlu0 %v1664, 108
  %v1712 = vpop.permute.xlu0 %1711
  %v1713 = vsel %vm155, %v1682, 0
  %v1715 = vsel %vm155, %v1684, 0
  %v1717 = vsel %vm155, %v1686, 0
  %v1719 = vsel %vm155, %v1688, 0
  %v1721 = vsel %vm155, %v1690, 0
  %v1723 = vsel %vm155, %v1692, 0
  %v1725 = vsel %vm155, %v1694, 0
  %v1727 = vsel %vm155, %v1696, 0
  %v1729 = vsel %vm155, %v1698, 0
  %v1731 = vsel %vm155, %v1700, 0
  %v1733 = vsel %vm155, %v1702, 0
  %v1735 = vsel %vm155, %v1704, 0
  %v1737 = vsel %vm155, %v1706, 0
  %v1739 = vsel %vm155, %v1708, 0
  %v1741 = vsel %vm155, %v1710, 0
  %v1743 = vsel %vm155, %v1712, 0
  %1745 = vmatprep.subr.mxu0 0.0
  %1746 = vmatpush1.xpose.msra.mxu0 %v1743
  %1747 = vmatprep.subr.mxu0 0.0
  %1748 = vmatpush1.xpose.msra.mxu0 %v1741
  %1749 = vmatprep.subr.mxu0 0.0
  %1750 = vmatpush1.xpose.msra.mxu0 %v1739
  %1751 = vmatprep.subr.mxu0 0.0
  %1752 = vmatpush1.xpose.msra.mxu0 %v1737
  %1753 = vmatprep.subr.mxu0 0.0
  %1754 = vmatpush1.xpose.msra.mxu0 %v1735
  %1755 = vmatprep.subr.mxu0 0.0
  %1756 = vmatpush1.xpose.msra.mxu0 %v1733
  %1757 = vmatprep.subr.mxu0 0.0
  %1758 = vmatpush1.xpose.msra.mxu0 %v1731
  %1759 = vmatprep.subr.mxu0 0.0
  %1760 = vmatpush1.xpose.msra.mxu0 %v1729
  %1761 = vmatprep.subr.mxu0 0.0
  %1762 = vmatpush1.xpose.msra.mxu0 %v1727
  %1763 = vmatprep.subr.mxu0 0.0
  %1764 = vmatpush1.xpose.msra.mxu0 %v1725
  %1765 = vmatprep.subr.mxu0 0.0
  %1766 = vmatpush1.xpose.msra.mxu0 %v1723
  %1767 = vmatprep.subr.mxu0 0.0
  %1768 = vmatpush1.xpose.msra.mxu0 %v1721
  %1769 = vmatprep.subr.mxu0 0.0
  %1770 = vmatpush1.xpose.msra.mxu0 %v1719
  %1771 = vmatprep.subr.mxu0 0.0
  %1772 = vmatpush1.xpose.msra.mxu0 %v1717
  %1773 = vmatprep.subr.mxu0 0.0
  %1774 = vmatpush1.xpose.msra.mxu0 %v1715
  %1775 = vmatprep.subr.mxu0 0.0
  %1776 = vmatpush1.xpose.msra.mxu0 %v1713
  %1777 = vmatprep.subr.mxu0 0.0
  %1778 = vmatpush2.xpose.msra.mxu0 0.0
  %1779 = vmatprep.subr.mxu0 0.0
  %1780 = vmatpush2.xpose.msra.mxu0 0.0
  %1781 = vmatprep.subr.mxu0 0.0
  %1782 = vmatpush2.xpose.msra.mxu0 0.0
  %1783 = vmatprep.subr.mxu0 0.0
  %1784 = vmatpush2.xpose.msra.mxu0 0.0
  %1785 = vmatprep.subr.mxu0 0.0
  %1786 = vmatpush2.xpose.msra.mxu0 0.0
  %1787 = vmatprep.subr.mxu0 0.0
  %1788 = vmatpush2.xpose.msra.mxu0 0.0
  %1789 = vmatprep.subr.mxu0 0.0
  %1790 = vmatpush2.xpose.msra.mxu0 0.0
  %1791 = vmatprep.subr.mxu0 0.0
  %1792 = vmatpush2.xpose.msra.mxu0 0.0
  %1793 = vmatprep.subr.mxu0 0.0
  %1794 = vmatpush2.xpose.msra.mxu0 0.0
  %1795 = vmatprep.subr.mxu0 0.0
  %1796 = vmatpush2.xpose.msra.mxu0 0.0
  %1797 = vmatprep.subr.mxu0 0.0
  %1798 = vmatpush2.xpose.msra.mxu0 0.0
  %1799 = vmatprep.subr.mxu0 0.0
  %1800 = vmatpush2.xpose.msra.mxu0 0.0
  %1801 = vmatprep.subr.mxu0 0.0
  %1802 = vmatpush2.xpose.msra.mxu0 0.0
  %1803 = vmatprep.subr.mxu0 0.0
  %1804 = vmatpush2.xpose.msra.mxu0 0.0
  %1805 = vmatprep.subr.mxu0 0.0
  %1806 = vmatpush2.xpose.msra.mxu0 0.0
  %1807 = vmatprep.subr.mxu0 0.0
  %1808 = vmatpush2.xpose.msra.mxu0 0.0
  %1809 = vmatprep.mubr.f32.mxu0 0.0
  %1810 = vmatmul.mubr.f32.gmra.mxu0 %v157
  %v1811 = vpop.f32.mrf.mxu0
  %v1812 = vadd.f32 %v78, %v1811
  %v1813 = vpop.f32.mrf.mxu0
  %1814 = vmatprep.mubr.f32.mxu0 0.0
  %1815 = vmatmul.mubr.f32.gmra.mxu0 %v160
  %v1816 = vpop.f32.mrf.mxu0
  %v1817 = vadd.f32 %v83, %v1816
  %v1818 = vpop.f32.mrf.mxu0
  %1819 = vmatprep.mubr.f32.mxu0 0.0
  %1820 = vmatmul.mubr.f32.gmra.mxu0 %v163
  %v1821 = vpop.f32.mrf.mxu0
  %v1822 = vadd.f32 %v88, %v1821
  %v1823 = vpop.f32.mrf.mxu0
  %1824 = vmatprep.mubr.f32.mxu0 0.0
  %1825 = vmatmul.mubr.f32.gmra.mxu0 %v166
  %v1826 = vpop.f32.mrf.mxu0
  %v1827 = vadd.f32 %v93, %v1826
  %v1828 = vpop.f32.mrf.mxu0
  %1829 = vmatprep.mubr.f32.mxu0 0.0
  %1830 = vmatmul.mubr.f32.gmra.mxu0 %v169
  %v1831 = vpop.f32.mrf.mxu0
  %v1832 = vadd.f32 %v98, %v1831
  %v1833 = vpop.f32.mrf.mxu0
  %1834 = vmatprep.mubr.f32.mxu0 0.0
  %1835 = vmatmul.mubr.f32.gmra.mxu0 %v172
  %v1836 = vpop.f32.mrf.mxu0
  %v1837 = vadd.f32 %v103, %v1836
  %v1838 = vpop.f32.mrf.mxu0
  %1839 = vmatprep.mubr.f32.mxu0 0.0
  %1840 = vmatmul.mubr.f32.gmra.mxu0 %v175
  %v1841 = vpop.f32.mrf.mxu0
  %v1842 = vadd.f32 %v108, %v1841
  %v1843 = vpop.f32.mrf.mxu0
  %1844 = vmatprep.mubr.f32.mxu0 0.0
  %1845 = vmatmul.mubr.f32.gmra.mxu0 %v178
  %v1846 = vpop.f32.mrf.mxu0
  %v1847 = vadd.f32 %v113, %v1846
  %v1848 = vpop.f32.mrf.mxu0
  %1849 = vmatprep.mubr.f32.mxu0 0.0
  %1850 = vmatmul.mubr.f32.gmra.mxu0 %v181
  %v1851 = vpop.f32.mrf.mxu0
  %v1852 = vadd.f32 %v118, %v1851
  %v1853 = vpop.f32.mrf.mxu0
  %1854 = vmatprep.mubr.f32.mxu0 0.0
  %1855 = vmatmul.mubr.f32.gmra.mxu0 %v184
  %v1856 = vpop.f32.mrf.mxu0
  %v1857 = vadd.f32 %v123, %v1856
  %v1858 = vpop.f32.mrf.mxu0
  %1859 = vmatprep.mubr.f32.mxu0 0.0
  %1860 = vmatmul.mubr.f32.gmra.mxu0 %v187
  %v1861 = vpop.f32.mrf.mxu0
  %v1862 = vadd.f32 %v128, %v1861
  %v1863 = vpop.f32.mrf.mxu0
  %1864 = vmatprep.mubr.f32.mxu0 0.0
  %1865 = vmatmul.mubr.f32.gmra.mxu0 %v190
  %v1866 = vpop.f32.mrf.mxu0
  %v1867 = vadd.f32 %v133, %v1866
  %v1868 = vpop.f32.mrf.mxu0
  %1869 = vmatprep.mubr.f32.mxu0 0.0
  %1870 = vmatmul.mubr.f32.gmra.mxu0 %v193
  %v1871 = vpop.f32.mrf.mxu0
  %v1872 = vadd.f32 %v138, %v1871
  %v1873 = vpop.f32.mrf.mxu0
  %1874 = vmatprep.mubr.f32.mxu0 0.0
  %1875 = vmatmul.mubr.f32.gmra.mxu0 %v196
  %v1876 = vpop.f32.mrf.mxu0
  %v1877 = vadd.f32 %v143, %v1876
  %v1878 = vpop.f32.mrf.mxu0
  %1879 = vmatprep.mubr.f32.mxu0 0.0
  %1880 = vmatmul.mubr.f32.gmra.mxu0 %v199
  %v1881 = vpop.f32.mrf.mxu0
  %v1882 = vadd.f32 %v148, %v1881
  %v1883 = vpop.f32.mrf.mxu0
  %1884 = vmatprep.mubr.f32.mxu0 0.0
  %1885 = vmatmul.mubr.f32.gmra.mxu0 %v202
  %v1886 = vpop.f32.mrf.mxu0
  %v1887 = vadd.f32 %v153, %v1886
  %v1888 = vpop.f32.mrf.mxu0
  %1889 = vdwg.mxu0
  %v1890 = vmax.f32 %v1812, 0.0
  %v1891 = vmax.f32 %v1817, 0.0
  %v1892 = vmax.f32 %v1822, 0.0
  %v1893 = vmax.f32 %v1827, 0.0
  %v1894 = vmax.f32 %v1832, 0.0
  %v1895 = vmax.f32 %v1837, 0.0
  %v1896 = vmax.f32 %v1842, 0.0
  %v1897 = vmax.f32 %v1847, 0.0
  %v1898 = vmax.f32 %v1852, 0.0
  %v1899 = vmax.f32 %v1857, 0.0
  %v1900 = vmax.f32 %v1862, 0.0
  %v1901 = vmax.f32 %v1867, 0.0
  %v1902 = vmax.f32 %v1872, 0.0
  %v1903 = vmax.f32 %v1877, 0.0
  %v1904 = vmax.f32 %v1882, 0.0
  %v1905 = vmax.f32 %v1887, 0.0
  %v1906 = vld [vmem:[#allocation2] sm:$0xff]
  %v1907 = vld [vmem:[#allocation2 + $0x8] sm:$0xff]
  %v1908 = vld [vmem:[#allocation2 + $0x10] sm:$0xff]
  %v1909 = vld [vmem:[#allocation2 + $0x18] sm:$0xff]
  %v1910 = vld [vmem:[#allocation2 + $0x20] sm:$0xff]
  %v1911 = vld [vmem:[#allocation2 + $0x28] sm:$0xff]
  %v1912 = vld [vmem:[#allocation2 + $0x30] sm:$0xff]
  %v1913 = vld [vmem:[#allocation2 + $0x38] sm:$0xff]
  %v1914 = vld [vmem:[#allocation2 + $0x40] sm:$0xff]
  %v1915 = vld [vmem:[#allocation2 + $0x48] sm:$0xff]
  %v1916 = vld [vmem:[#allocation2 + $0x50] sm:$0xff]
  %v1917 = vld [vmem:[#allocation2 + $0x58] sm:$0xff]
  %v1918 = vld [vmem:[#allocation2 + $0x60] sm:$0xff]
  %v1919 = vld [vmem:[#allocation2 + $0x68] sm:$0xff]
  %v1920 = vld [vmem:[#allocation2 + $0x70] sm:$0xff]
  %v1921 = vld [vmem:[#allocation2 + $0x78] sm:$0xff]
  %v1922 = vadd.f32 %v1906, %v1890
  %v1923 = vadd.f32 %v1907, %v1891
  %v1924 = vadd.f32 %v1908, %v1892
  %v1925 = vadd.f32 %v1909, %v1893
  %v1926 = vadd.f32 %v1910, %v1894
  %v1927 = vadd.f32 %v1911, %v1895
  %v1928 = vadd.f32 %v1912, %v1896
  %v1929 = vadd.f32 %v1913, %v1897
  %v1930 = vadd.f32 %v1914, %v1898
  %v1931 = vadd.f32 %v1915, %v1899
  %v1932 = vadd.f32 %v1916, %v1900
  %v1933 = vadd.f32 %v1917, %v1901
  %v1934 = vadd.f32 %v1918, %v1902
  %v1935 = vadd.f32 %v1919, %v1903
  %v1936 = vadd.f32 %v1920, %v1904
  %v1937 = vadd.f32 %v1921, %v1905
  %1938 = vst [vmem:[#allocation2] sm:$0xff] %v1922
  %1939 = vst [vmem:[#allocation2 + $0x8] sm:$0xff] %v1923
  %1940 = vst [vmem:[#allocation2 + $0x10] sm:$0xff] %v1924
  %1941 = vst [vmem:[#allocation2 + $0x18] sm:$0xff] %v1925
  %1942 = vst [vmem:[#allocation2 + $0x20] sm:$0xff] %v1926
  %1943 = vst [vmem:[#allocation2 + $0x28] sm:$0xff] %v1927
  %1944 = vst [vmem:[#allocation2 + $0x30] sm:$0xff] %v1928
  %1945 = vst [vmem:[#allocation2 + $0x38] sm:$0xff] %v1929
  %1946 = vst [vmem:[#allocation2 + $0x40] sm:$0xff] %v1930
  %1947 = vst [vmem:[#allocation2 + $0x48] sm:$0xff] %v1931
  %1948 = vst [vmem:[#allocation2 + $0x50] sm:$0xff] %v1932
  %1949 = vst [vmem:[#allocation2 + $0x58] sm:$0xff] %v1933
  %1950 = vst [vmem:[#allocation2 + $0x60] sm:$0xff] %v1934
  %1951 = vst [vmem:[#allocation2 + $0x68] sm:$0xff] %v1935
  %1952 = vst [vmem:[#allocation2 + $0x70] sm:$0xff] %v1936
  %1953 = vst [vmem:[#allocation2 + $0x78] sm:$0xff] %v1937
  %v1954 = vld [vmem:[%s0] sm:$0xff]
  %v1955 = vld [vmem:[%s0 + $0x8] sm:$0xff]
  %v1956 = vld [vmem:[%s0 + $0x10] sm:$0xff]
  %v1957 = vld [vmem:[%s0 + $0x18] sm:$0xff]
  %v1958 = vld [vmem:[%s0 + $0x20] sm:$0xff]
  %v1959 = vld [vmem:[%s0 + $0x28] sm:$0xff]
  %v1960 = vld [vmem:[%s0 + $0x30] sm:$0xff]
  %v1961 = vld [vmem:[%s0 + $0x38] sm:$0xff]
  %v1962 = vld [vmem:[%s0 + $0x40] sm:$0xff]
  %v1963 = vld [vmem:[%s0 + $0x48] sm:$0xff]
  %v1964 = vld [vmem:[%s0 + $0x50] sm:$0xff]
  %v1965 = vld [vmem:[%s0 + $0x58] sm:$0xff]
  %v1966 = vld [vmem:[%s0 + $0x60] sm:$0xff]
  %v1967 = vld [vmem:[%s0 + $0x68] sm:$0xff]
  %v1968 = vld [vmem:[%s0 + $0x70] sm:$0xff]
  %v1969 = vld [vmem:[%s0 + $0x78] sm:$0xff]
  %1986 = vrot.lane.b32.xlu0 %v1954, 104
  %v1987 = vpop.permute.xlu0 %1986
  %1988 = vrot.lane.b32.xlu0 %v1955, 104
  %v1989 = vpop.permute.xlu0 %1988
  %1990 = vrot.lane.b32.xlu0 %v1956, 104
  %v1991 = vpop.permute.xlu0 %1990
  %1992 = vrot.lane.b32.xlu0 %v1957, 104
  %v1993 = vpop.permute.xlu0 %1992
  %1994 = vrot.lane.b32.xlu0 %v1958, 104
  %v1995 = vpop.permute.xlu0 %1994
  %1996 = vrot.lane.b32.xlu0 %v1959, 104
  %v1997 = vpop.permute.xlu0 %1996
  %1998 = vrot.lane.b32.xlu0 %v1960, 104
  %v1999 = vpop.permute.xlu0 %1998
  %2000 = vrot.lane.b32.xlu0 %v1961, 104
  %v2001 = vpop.permute.xlu0 %2000
  %2002 = vrot.lane.b32.xlu0 %v1962, 104
  %v2003 = vpop.permute.xlu0 %2002
  %2004 = vrot.lane.b32.xlu0 %v1963, 104
  %v2005 = vpop.permute.xlu0 %2004
  %2006 = vrot.lane.b32.xlu0 %v1964, 104
  %v2007 = vpop.permute.xlu0 %2006
  %2008 = vrot.lane.b32.xlu0 %v1965, 104
  %v2009 = vpop.permute.xlu0 %2008
  %2010 = vrot.lane.b32.xlu0 %v1966, 104
  %v2011 = vpop.permute.xlu0 %2010
  %2012 = vrot.lane.b32.xlu0 %v1967, 104
  %v2013 = vpop.permute.xlu0 %2012
  %2014 = vrot.lane.b32.xlu0 %v1968, 104
  %v2015 = vpop.permute.xlu0 %2014
  %2016 = vrot.lane.b32.xlu0 %v1969, 104
  %v2017 = vpop.permute.xlu0 %2016
  %v2018 = vsel %vm155, %v1987, 0
  %v2020 = vsel %vm155, %v1989, 0
  %v2022 = vsel %vm155, %v1991, 0
  %v2024 = vsel %vm155, %v1993, 0
  %v2026 = vsel %vm155, %v1995, 0
  %v2028 = vsel %vm155, %v1997, 0
  %v2030 = vsel %vm155, %v1999, 0
  %v2032 = vsel %vm155, %v2001, 0
  %v2034 = vsel %vm155, %v2003, 0
  %v2036 = vsel %vm155, %v2005, 0
  %v2038 = vsel %vm155, %v2007, 0
  %v2040 = vsel %vm155, %v2009, 0
  %v2042 = vsel %vm155, %v2011, 0
  %v2044 = vsel %vm155, %v2013, 0
  %v2046 = vsel %vm155, %v2015, 0
  %v2048 = vsel %vm155, %v2017, 0
  %2050 = vmatprep.subr.mxu0 0.0
  %2051 = vmatpush1.xpose.msra.mxu0 %v2048
  %2052 = vmatprep.subr.mxu0 0.0
  %2053 = vmatpush1.xpose.msra.mxu0 %v2046
  %2054 = vmatprep.subr.mxu0 0.0
  %2055 = vmatpush1.xpose.msra.mxu0 %v2044
  %2056 = vmatprep.subr.mxu0 0.0
  %2057 = vmatpush1.xpose.msra.mxu0 %v2042
  %2058 = vmatprep.subr.mxu0 0.0
  %2059 = vmatpush1.xpose.msra.mxu0 %v2040
  %2060 = vmatprep.subr.mxu0 0.0
  %2061 = vmatpush1.xpose.msra.mxu0 %v2038
  %2062 = vmatprep.subr.mxu0 0.0
  %2063 = vmatpush1.xpose.msra.mxu0 %v2036
  %2064 = vmatprep.subr.mxu0 0.0
  %2065 = vmatpush1.xpose.msra.mxu0 %v2034
  %2066 = vmatprep.subr.mxu0 0.0
  %2067 = vmatpush1.xpose.msra.mxu0 %v2032
  %2068 = vmatprep.subr.mxu0 0.0
  %2069 = vmatpush1.xpose.msra.mxu0 %v2030
  %2070 = vmatprep.subr.mxu0 0.0
  %2071 = vmatpush1.xpose.msra.mxu0 %v2028
  %2072 = vmatprep.subr.mxu0 0.0
  %2073 = vmatpush1.xpose.msra.mxu0 %v2026
  %2074 = vmatprep.subr.mxu0 0.0
  %2075 = vmatpush1.xpose.msra.mxu0 %v2024
  %2076 = vmatprep.subr.mxu0 0.0
  %2077 = vmatpush1.xpose.msra.mxu0 %v2022
  %2078 = vmatprep.subr.mxu0 0.0
  %2079 = vmatpush1.xpose.msra.mxu0 %v2020
  %2080 = vmatprep.subr.mxu0 0.0
  %2081 = vmatpush1.xpose.msra.mxu0 %v2018
  %2082 = vmatprep.subr.mxu0 0.0
  %2083 = vmatpush2.xpose.msra.mxu0 0.0
  %2084 = vmatprep.subr.mxu0 0.0
  %2085 = vmatpush2.xpose.msra.mxu0 0.0
  %2086 = vmatprep.subr.mxu0 0.0
  %2087 = vmatpush2.xpose.msra.mxu0 0.0
  %2088 = vmatprep.subr.mxu0 0.0
  %2089 = vmatpush2.xpose.msra.mxu0 0.0
  %2090 = vmatprep.subr.mxu0 0.0
  %2091 = vmatpush2.xpose.msra.mxu0 0.0
  %2092 = vmatprep.subr.mxu0 0.0
  %2093 = vmatpush2.xpose.msra.mxu0 0.0
  %2094 = vmatprep.subr.mxu0 0.0
  %2095 = vmatpush2.xpose.msra.mxu0 0.0
  %2096 = vmatprep.subr.mxu0 0.0
  %2097 = vmatpush2.xpose.msra.mxu0 0.0
  %2098 = vmatprep.subr.mxu0 0.0
  %2099 = vmatpush2.xpose.msra.mxu0 0.0
  %2100 = vmatprep.subr.mxu0 0.0
  %2101 = vmatpush2.xpose.msra.mxu0 0.0
  %2102 = vmatprep.subr.mxu0 0.0
  %2103 = vmatpush2.xpose.msra.mxu0 0.0
  %2104 = vmatprep.subr.mxu0 0.0
  %2105 = vmatpush2.xpose.msra.mxu0 0.0
  %2106 = vmatprep.subr.mxu0 0.0
  %2107 = vmatpush2.xpose.msra.mxu0 0.0
  %2108 = vmatprep.subr.mxu0 0.0
  %2109 = vmatpush2.xpose.msra.mxu0 0.0
  %2110 = vmatprep.subr.mxu0 0.0
  %2111 = vmatpush2.xpose.msra.mxu0 0.0
  %2112 = vmatprep.subr.mxu0 0.0
  %2113 = vmatpush2.xpose.msra.mxu0 0.0
  %2114 = vmatprep.mubr.f32.mxu0 0.0
  %2115 = vmatmul.mubr.f32.gmra.mxu0 %v157
  %v2116 = vpop.f32.mrf.mxu0
  %v2117 = vadd.f32 %v78, %v2116
  %v2118 = vpop.f32.mrf.mxu0
  %2119 = vmatprep.mubr.f32.mxu0 0.0
  %2120 = vmatmul.mubr.f32.gmra.mxu0 %v160
  %v2121 = vpop.f32.mrf.mxu0
  %v2122 = vadd.f32 %v83, %v2121
  %v2123 = vpop.f32.mrf.mxu0
  %2124 = vmatprep.mubr.f32.mxu0 0.0
  %2125 = vmatmul.mubr.f32.gmra.mxu0 %v163
  %v2126 = vpop.f32.mrf.mxu0
  %v2127 = vadd.f32 %v88, %v2126
  %v2128 = vpop.f32.mrf.mxu0
  %2129 = vmatprep.mubr.f32.mxu0 0.0
  %2130 = vmatmul.mubr.f32.gmra.mxu0 %v166
  %v2131 = vpop.f32.mrf.mxu0
  %v2132 = vadd.f32 %v93, %v2131
  %v2133 = vpop.f32.mrf.mxu0
  %2134 = vmatprep.mubr.f32.mxu0 0.0
  %2135 = vmatmul.mubr.f32.gmra.mxu0 %v169
  %v2136 = vpop.f32.mrf.mxu0
  %v2137 = vadd.f32 %v98, %v2136
  %v2138 = vpop.f32.mrf.mxu0
  %2139 = vmatprep.mubr.f32.mxu0 0.0
  %2140 = vmatmul.mubr.f32.gmra.mxu0 %v172
  %v2141 = vpop.f32.mrf.mxu0
  %v2142 = vadd.f32 %v103, %v2141
  %v2143 = vpop.f32.mrf.mxu0
  %2144 = vmatprep.mubr.f32.mxu0 0.0
  %2145 = vmatmul.mubr.f32.gmra.mxu0 %v175
  %v2146 = vpop.f32.mrf.mxu0
  %v2147 = vadd.f32 %v108, %v2146
  %v2148 = vpop.f32.mrf.mxu0
  %2149 = vmatprep.mubr.f32.mxu0 0.0
  %2150 = vmatmul.mubr.f32.gmra.mxu0 %v178
  %v2151 = vpop.f32.mrf.mxu0
  %v2152 = vadd.f32 %v113, %v2151
  %v2153 = vpop.f32.mrf.mxu0
  %2154 = vmatprep.mubr.f32.mxu0 0.0
  %2155 = vmatmul.mubr.f32.gmra.mxu0 %v181
  %v2156 = vpop.f32.mrf.mxu0
  %v2157 = vadd.f32 %v118, %v2156
  %v2158 = vpop.f32.mrf.mxu0
  %2159 = vmatprep.mubr.f32.mxu0 0.0
  %2160 = vmatmul.mubr.f32.gmra.mxu0 %v184
  %v2161 = vpop.f32.mrf.mxu0
  %v2162 = vadd.f32 %v123, %v2161
  %v2163 = vpop.f32.mrf.mxu0
  %2164 = vmatprep.mubr.f32.mxu0 0.0
  %2165 = vmatmul.mubr.f32.gmra.mxu0 %v187
  %v2166 = vpop.f32.mrf.mxu0
  %v2167 = vadd.f32 %v128, %v2166
  %v2168 = vpop.f32.mrf.mxu0
  %2169 = vmatprep.mubr.f32.mxu0 0.0
  %2170 = vmatmul.mubr.f32.gmra.mxu0 %v190
  %v2171 = vpop.f32.mrf.mxu0
  %v2172 = vadd.f32 %v133, %v2171
  %v2173 = vpop.f32.mrf.mxu0
  %2174 = vmatprep.mubr.f32.mxu0 0.0
  %2175 = vmatmul.mubr.f32.gmra.mxu0 %v193
  %v2176 = vpop.f32.mrf.mxu0
  %v2177 = vadd.f32 %v138, %v2176
  %v2178 = vpop.f32.mrf.mxu0
  %2179 = vmatprep.mubr.f32.mxu0 0.0
  %2180 = vmatmul.mubr.f32.gmra.mxu0 %v196
  %v2181 = vpop.f32.mrf.mxu0
  %v2182 = vadd.f32 %v143, %v2181
  %v2183 = vpop.f32.mrf.mxu0
  %2184 = vmatprep.mubr.f32.mxu0 0.0
  %2185 = vmatmul.mubr.f32.gmra.mxu0 %v199
  %v2186 = vpop.f32.mrf.mxu0
  %v2187 = vadd.f32 %v148, %v2186
  %v2188 = vpop.f32.mrf.mxu0
  %2189 = vmatprep.mubr.f32.mxu0 0.0
  %2190 = vmatmul.mubr.f32.gmra.mxu0 %v202
  %v2191 = vpop.f32.mrf.mxu0
  %v2192 = vadd.f32 %v153, %v2191
  %v2193 = vpop.f32.mrf.mxu0
  %2194 = vdwg.mxu0
  %v2195 = vmax.f32 %v2117, 0.0
  %v2196 = vmax.f32 %v2122, 0.0
  %v2197 = vmax.f32 %v2127, 0.0
  %v2198 = vmax.f32 %v2132, 0.0
  %v2199 = vmax.f32 %v2137, 0.0
  %v2200 = vmax.f32 %v2142, 0.0
  %v2201 = vmax.f32 %v2147, 0.0
  %v2202 = vmax.f32 %v2152, 0.0
  %v2203 = vmax.f32 %v2157, 0.0
  %v2204 = vmax.f32 %v2162, 0.0
  %v2205 = vmax.f32 %v2167, 0.0
  %v2206 = vmax.f32 %v2172, 0.0
  %v2207 = vmax.f32 %v2177, 0.0
  %v2208 = vmax.f32 %v2182, 0.0
  %v2209 = vmax.f32 %v2187, 0.0
  %v2210 = vmax.f32 %v2192, 0.0
  %v2211 = vld [vmem:[#allocation2] sm:$0xff]
  %v2212 = vld [vmem:[#allocation2 + $0x8] sm:$0xff]
  %v2213 = vld [vmem:[#allocation2 + $0x10] sm:$0xff]
  %v2214 = vld [vmem:[#allocation2 + $0x18] sm:$0xff]
  %v2215 = vld [vmem:[#allocation2 + $0x20] sm:$0xff]
  %v2216 = vld [vmem:[#allocation2 + $0x28] sm:$0xff]
  %v2217 = vld [vmem:[#allocation2 + $0x30] sm:$0xff]
  %v2218 = vld [vmem:[#allocation2 + $0x38] sm:$0xff]
  %v2219 = vld [vmem:[#allocation2 + $0x40] sm:$0xff]
  %v2220 = vld [vmem:[#allocation2 + $0x48] sm:$0xff]
  %v2221 = vld [vmem:[#allocation2 + $0x50] sm:$0xff]
  %v2222 = vld [vmem:[#allocation2 + $0x58] sm:$0xff]
  %v2223 = vld [vmem:[#allocation2 + $0x60] sm:$0xff]
  %v2224 = vld [vmem:[#allocation2 + $0x68] sm:$0xff]
  %v2225 = vld [vmem:[#allocation2 + $0x70] sm:$0xff]
  %v2226 = vld [vmem:[#allocation2 + $0x78] sm:$0xff]
  %v2227 = vadd.f32 %v2211, %v2195
  %v2228 = vadd.f32 %v2212, %v2196
  %v2229 = vadd.f32 %v2213, %v2197
  %v2230 = vadd.f32 %v2214, %v2198
  %v2231 = vadd.f32 %v2215, %v2199
  %v2232 = vadd.f32 %v2216, %v2200
  %v2233 = vadd.f32 %v2217, %v2201
  %v2234 = vadd.f32 %v2218, %v2202
  %v2235 = vadd.f32 %v2219, %v2203
  %v2236 = vadd.f32 %v2220, %v2204
  %v2237 = vadd.f32 %v2221, %v2205
  %v2238 = vadd.f32 %v2222, %v2206
  %v2239 = vadd.f32 %v2223, %v2207
  %v2240 = vadd.f32 %v2224, %v2208
  %v2241 = vadd.f32 %v2225, %v2209
  %v2242 = vadd.f32 %v2226, %v2210
  %2243 = vst [vmem:[#allocation2] sm:$0xff] %v2227
  %2244 = vst [vmem:[#allocation2 + $0x8] sm:$0xff] %v2228
  %2245 = vst [vmem:[#allocation2 + $0x10] sm:$0xff] %v2229
  %2246 = vst [vmem:[#allocation2 + $0x18] sm:$0xff] %v2230
  %2247 = vst [vmem:[#allocation2 + $0x20] sm:$0xff] %v2231
  %2248 = vst [vmem:[#allocation2 + $0x28] sm:$0xff] %v2232
  %2249 = vst [vmem:[#allocation2 + $0x30] sm:$0xff] %v2233
  %2250 = vst [vmem:[#allocation2 + $0x38] sm:$0xff] %v2234
  %2251 = vst [vmem:[#allocation2 + $0x40] sm:$0xff] %v2235
  %2252 = vst [vmem:[#allocation2 + $0x48] sm:$0xff] %v2236
  %2253 = vst [vmem:[#allocation2 + $0x50] sm:$0xff] %v2237
  %2254 = vst [vmem:[#allocation2 + $0x58] sm:$0xff] %v2238
  %2255 = vst [vmem:[#allocation2 + $0x60] sm:$0xff] %v2239
  %2256 = vst [vmem:[#allocation2 + $0x68] sm:$0xff] %v2240
  %2257 = vst [vmem:[#allocation2 + $0x70] sm:$0xff] %v2241
  %2258 = vst [vmem:[#allocation2 + $0x78] sm:$0xff] %v2242
  %v2259 = vld [vmem:[%s0] sm:$0xff]
  %v2260 = vld [vmem:[%s0 + $0x8] sm:$0xff]
  %v2261 = vld [vmem:[%s0 + $0x10] sm:$0xff]
  %v2262 = vld [vmem:[%s0 + $0x18] sm:$0xff]
  %v2263 = vld [vmem:[%s0 + $0x20] sm:$0xff]
  %v2264 = vld [vmem:[%s0 + $0x28] sm:$0xff]
  %v2265 = vld [vmem:[%s0 + $0x30] sm:$0xff]
  %v2266 = vld [vmem:[%s0 + $0x38] sm:$0xff]
  %v2267 = vld [vmem:[%s0 + $0x40] sm:$0xff]
  %v2268 = vld [vmem:[%s0 + $0x48] sm:$0xff]
  %v2269 = vld [vmem:[%s0 + $0x50] sm:$0xff]
  %v2270 = vld [vmem:[%s0 + $0x58] sm:$0xff]
  %v2271 = vld [vmem:[%s0 + $0x60] sm:$0xff]
  %v2272 = vld [vmem:[%s0 + $0x68] sm:$0xff]
  %v2273 = vld [vmem:[%s0 + $0x70] sm:$0xff]
  %v2274 = vld [vmem:[%s0 + $0x78] sm:$0xff]
  %2291 = vrot.lane.b32.xlu0 %v2259, 100
  %v2292 = vpop.permute.xlu0 %2291
  %2293 = vrot.lane.b32.xlu0 %v2260, 100
  %v2294 = vpop.permute.xlu0 %2293
  %2295 = vrot.lane.b32.xlu0 %v2261, 100
  %v2296 = vpop.permute.xlu0 %2295
  %2297 = vrot.lane.b32.xlu0 %v2262, 100
  %v2298 = vpop.permute.xlu0 %2297
  %2299 = vrot.lane.b32.xlu0 %v2263, 100
  %v2300 = vpop.permute.xlu0 %2299
  %2301 = vrot.lane.b32.xlu0 %v2264, 100
  %v2302 = vpop.permute.xlu0 %2301
  %2303 = vrot.lane.b32.xlu0 %v2265, 100
  %v2304 = vpop.permute.xlu0 %2303
  %2305 = vrot.lane.b32.xlu0 %v2266, 100
  %v2306 = vpop.permute.xlu0 %2305
  %2307 = vrot.lane.b32.xlu0 %v2267, 100
  %v2308 = vpop.permute.xlu0 %2307
  %2309 = vrot.lane.b32.xlu0 %v2268, 100
  %v2310 = vpop.permute.xlu0 %2309
  %2311 = vrot.lane.b32.xlu0 %v2269, 100
  %v2312 = vpop.permute.xlu0 %2311
  %2313 = vrot.lane.b32.xlu0 %v2270, 100
  %v2314 = vpop.permute.xlu0 %2313
  %2315 = vrot.lane.b32.xlu0 %v2271, 100
  %v2316 = vpop.permute.xlu0 %2315
  %2317 = vrot.lane.b32.xlu0 %v2272, 100
  %v2318 = vpop.permute.xlu0 %2317
  %2319 = vrot.lane.b32.xlu0 %v2273, 100
  %v2320 = vpop.permute.xlu0 %2319
  %2321 = vrot.lane.b32.xlu0 %v2274, 100
  %v2322 = vpop.permute.xlu0 %2321
  %v2323 = vsel %vm155, %v2292, 0
  %v2325 = vsel %vm155, %v2294, 0
  %v2327 = vsel %vm155, %v2296, 0
  %v2329 = vsel %vm155, %v2298, 0
  %v2331 = vsel %vm155, %v2300, 0
  %v2333 = vsel %vm155, %v2302, 0
  %v2335 = vsel %vm155, %v2304, 0
  %v2337 = vsel %vm155, %v2306, 0
  %v2339 = vsel %vm155, %v2308, 0
  %v2341 = vsel %vm155, %v2310, 0
  %v2343 = vsel %vm155, %v2312, 0
  %v2345 = vsel %vm155, %v2314, 0
  %v2347 = vsel %vm155, %v2316, 0
  %v2349 = vsel %vm155, %v2318, 0
  %v2351 = vsel %vm155, %v2320, 0
  %v2353 = vsel %vm155, %v2322, 0
  %2355 = vmatprep.subr.mxu0 0.0
  %2356 = vmatpush1.xpose.msra.mxu0 %v2353
  %2357 = vmatprep.subr.mxu0 0.0
  %2358 = vmatpush1.xpose.msra.mxu0 %v2351
  %2359 = vmatprep.subr.mxu0 0.0
  %2360 = vmatpush1.xpose.msra.mxu0 %v2349
  %2361 = vmatprep.subr.mxu0 0.0
  %2362 = vmatpush1.xpose.msra.mxu0 %v2347
  %2363 = vmatprep.subr.mxu0 0.0
  %2364 = vmatpush1.xpose.msra.mxu0 %v2345
  %2365 = vmatprep.subr.mxu0 0.0
  %2366 = vmatpush1.xpose.msra.mxu0 %v2343
  %2367 = vmatprep.subr.mxu0 0.0
  %2368 = vmatpush1.xpose.msra.mxu0 %v2341
  %2369 = vmatprep.subr.mxu0 0.0
  %2370 = vmatpush1.xpose.msra.mxu0 %v2339
  %2371 = vmatprep.subr.mxu0 0.0
  %2372 = vmatpush1.xpose.msra.mxu0 %v2337
  %2373 = vmatprep.subr.mxu0 0.0
  %2374 = vmatpush1.xpose.msra.mxu0 %v2335
  %2375 = vmatprep.subr.mxu0 0.0
  %2376 = vmatpush1.xpose.msra.mxu0 %v2333
  %2377 = vmatprep.subr.mxu0 0.0
  %2378 = vmatpush1.xpose.msra.mxu0 %v2331
  %2379 = vmatprep.subr.mxu0 0.0
  %2380 = vmatpush1.xpose.msra.mxu0 %v2329
  %2381 = vmatprep.subr.mxu0 0.0
  %2382 = vmatpush1.xpose.msra.mxu0 %v2327
  %2383 = vmatprep.subr.mxu0 0.0
  %2384 = vmatpush1.xpose.msra.mxu0 %v2325
  %2385 = vmatprep.subr.mxu0 0.0
  %2386 = vmatpush1.xpose.msra.mxu0 %v2323
  %2387 = vmatprep.subr.mxu0 0.0
  %2388 = vmatpush2.xpose.msra.mxu0 0.0
  %2389 = vmatprep.subr.mxu0 0.0
  %2390 = vmatpush2.xpose.msra.mxu0 0.0
  %2391 = vmatprep.subr.mxu0 0.0
  %2392 = vmatpush2.xpose.msra.mxu0 0.0
  %2393 = vmatprep.subr.mxu0 0.0
  %2394 = vmatpush2.xpose.msra.mxu0 0.0
  %2395 = vmatprep.subr.mxu0 0.0
  %2396 = vmatpush2.xpose.msra.mxu0 0.0
  %2397 = vmatprep.subr.mxu0 0.0
  %2398 = vmatpush2.xpose.msra.mxu0 0.0
  %2399 = vmatprep.subr.mxu0 0.0
  %2400 = vmatpush2.xpose.msra.mxu0 0.0
  %2401 = vmatprep.subr.mxu0 0.0
  %2402 = vmatpush2.xpose.msra.mxu0 0.0
  %2403 = vmatprep.subr.mxu0 0.0
  %2404 = vmatpush2.xpose.msra.mxu0 0.0
  %2405 = vmatprep.subr.mxu0 0.0
  %2406 = vmatpush2.xpose.msra.mxu0 0.0
  %2407 = vmatprep.subr.mxu0 0.0
  %2408 = vmatpush2.xpose.msra.mxu0 0.0
  %2409 = vmatprep.subr.mxu0 0.0
  %2410 = vmatpush2.xpose.msra.mxu0 0.0
  %2411 = vmatprep.subr.mxu0 0.0
  %2412 = vmatpush2.xpose.msra.mxu0 0.0
  %2413 = vmatprep.subr.mxu0 0.0
  %2414 = vmatpush2.xpose.msra.mxu0 0.0
  %2415 = vmatprep.subr.mxu0 0.0
  %2416 = vmatpush2.xpose.msra.mxu0 0.0
  %2417 = vmatprep.subr.mxu0 0.0
  %2418 = vmatpush2.xpose.msra.mxu0 0.0
  %2419 = vmatprep.mubr.f32.mxu0 0.0
  %2420 = vmatmul.mubr.f32.gmra.mxu0 %v157
  %v2421 = vpop.f32.mrf.mxu0
  %v2422 = vadd.f32 %v78, %v2421
  %v2423 = vpop.f32.mrf.mxu0
  %2424 = vmatprep.mubr.f32.mxu0 0.0
  %2425 = vmatmul.mubr.f32.gmra.mxu0 %v160
  %v2426 = vpop.f32.mrf.mxu0
  %v2427 = vadd.f32 %v83, %v2426
  %v2428 = vpop.f32.mrf.mxu0
  %2429 = vmatprep.mubr.f32.mxu0 0.0
  %2430 = vmatmul.mubr.f32.gmra.mxu0 %v163
  %v2431 = vpop.f32.mrf.mxu0
  %v2432 = vadd.f32 %v88, %v2431
  %v2433 = vpop.f32.mrf.mxu0
  %2434 = vmatprep.mubr.f32.mxu0 0.0
  %2435 = vmatmul.mubr.f32.gmra.mxu0 %v166
  %v2436 = vpop.f32.mrf.mxu0
  %v2437 = vadd.f32 %v93, %v2436
  %v2438 = vpop.f32.mrf.mxu0
  %2439 = vmatprep.mubr.f32.mxu0 0.0
  %2440 = vmatmul.mubr.f32.gmra.mxu0 %v169
  %v2441 = vpop.f32.mrf.mxu0
  %v2442 = vadd.f32 %v98, %v2441
  %v2443 = vpop.f32.mrf.mxu0
  %2444 = vmatprep.mubr.f32.mxu0 0.0
  %2445 = vmatmul.mubr.f32.gmra.mxu0 %v172
  %v2446 = vpop.f32.mrf.mxu0
  %v2447 = vadd.f32 %v103, %v2446
  %v2448 = vpop.f32.mrf.mxu0
  %2449 = vmatprep.mubr.f32.mxu0 0.0
  %2450 = vmatmul.mubr.f32.gmra.mxu0 %v175
  %v2451 = vpop.f32.mrf.mxu0
  %v2452 = vadd.f32 %v108, %v2451
  %v2453 = vpop.f32.mrf.mxu0
  %2454 = vmatprep.mubr.f32.mxu0 0.0
  %2455 = vmatmul.mubr.f32.gmra.mxu0 %v178
  %v2456 = vpop.f32.mrf.mxu0
  %v2457 = vadd.f32 %v113, %v2456
  %v2458 = vpop.f32.mrf.mxu0
  %2459 = vmatprep.mubr.f32.mxu0 0.0
  %2460 = vmatmul.mubr.f32.gmra.mxu0 %v181
  %v2461 = vpop.f32.mrf.mxu0
  %v2462 = vadd.f32 %v118, %v2461
  %v2463 = vpop.f32.mrf.mxu0
  %2464 = vmatprep.mubr.f32.mxu0 0.0
  %2465 = vmatmul.mubr.f32.gmra.mxu0 %v184
  %v2466 = vpop.f32.mrf.mxu0
  %v2467 = vadd.f32 %v123, %v2466
  %v2468 = vpop.f32.mrf.mxu0
  %2469 = vmatprep.mubr.f32.mxu0 0.0
  %2470 = vmatmul.mubr.f32.gmra.mxu0 %v187
  %v2471 = vpop.f32.mrf.mxu0
  %v2472 = vadd.f32 %v128, %v2471
  %v2473 = vpop.f32.mrf.mxu0
  %2474 = vmatprep.mubr.f32.mxu0 0.0
  %2475 = vmatmul.mubr.f32.gmra.mxu0 %v190
  %v2476 = vpop.f32.mrf.mxu0
  %v2477 = vadd.f32 %v133, %v2476
  %v2478 = vpop.f32.mrf.mxu0
  %2479 = vmatprep.mubr.f32.mxu0 0.0
  %2480 = vmatmul.mubr.f32.gmra.mxu0 %v193
  %v2481 = vpop.f32.mrf.mxu0
  %v2482 = vadd.f32 %v138, %v2481
  %v2483 = vpop.f32.mrf.mxu0
  %2484 = vmatprep.mubr.f32.mxu0 0.0
  %2485 = vmatmul.mubr.f32.gmra.mxu0 %v196
  %v2486 = vpop.f32.mrf.mxu0
  %v2487 = vadd.f32 %v143, %v2486
  %v2488 = vpop.f32.mrf.mxu0
  %2489 = vmatprep.mubr.f32.mxu0 0.0
  %2490 = vmatmul.mubr.f32.gmra.mxu0 %v199
  %v2491 = vpop.f32.mrf.mxu0
  %v2492 = vadd.f32 %v148, %v2491
  %v2493 = vpop.f32.mrf.mxu0
  %2494 = vmatprep.mubr.f32.mxu0 0.0
  %2495 = vmatmul.mubr.f32.gmra.mxu0 %v202
  %v2496 = vpop.f32.mrf.mxu0
  %v2497 = vadd.f32 %v153, %v2496
  %v2498 = vpop.f32.mrf.mxu0
  %2499 = vdwg.mxu0
  %v2500 = vmax.f32 %v2422, 0.0
  %v2501 = vmax.f32 %v2427, 0.0
  %v2502 = vmax.f32 %v2432, 0.0
  %v2503 = vmax.f32 %v2437, 0.0
  %v2504 = vmax.f32 %v2442, 0.0
  %v2505 = vmax.f32 %v2447, 0.0
  %v2506 = vmax.f32 %v2452, 0.0
  %v2507 = vmax.f32 %v2457, 0.0
  %v2508 = vmax.f32 %v2462, 0.0
  %v2509 = vmax.f32 %v2467, 0.0
  %v2510 = vmax.f32 %v2472, 0.0
  %v2511 = vmax.f32 %v2477, 0.0
  %v2512 = vmax.f32 %v2482, 0.0
  %v2513 = vmax.f32 %v2487, 0.0
  %v2514 = vmax.f32 %v2492, 0.0
  %v2515 = vmax.f32 %v2497, 0.0
  %v2516 = vld [vmem:[#allocation2] sm:$0xff]
  %v2517 = vld [vmem:[#allocation2 + $0x8] sm:$0xff]
  %v2518 = vld [vmem:[#allocation2 + $0x10] sm:$0xff]
  %v2519 = vld [vmem:[#allocation2 + $0x18] sm:$0xff]
  %v2520 = vld [vmem:[#allocation2 + $0x20] sm:$0xff]
  %v2521 = vld [vmem:[#allocation2 + $0x28] sm:$0xff]
  %v2522 = vld [vmem:[#allocation2 + $0x30] sm:$0xff]
  %v2523 = vld [vmem:[#allocation2 + $0x38] sm:$0xff]
  %v2524 = vld [vmem:[#allocation2 + $0x40] sm:$0xff]
  %v2525 = vld [vmem:[#allocation2 + $0x48] sm:$0xff]
  %v2526 = vld [vmem:[#allocation2 + $0x50] sm:$0xff]
  %v2527 = vld [vmem:[#allocation2 + $0x58] sm:$0xff]
  %v2528 = vld [vmem:[#allocation2 + $0x60] sm:$0xff]
  %v2529 = vld [vmem:[#allocation2 + $0x68] sm:$0xff]
  %v2530 = vld [vmem:[#allocation2 + $0x70] sm:$0xff]
  %v2531 = vld [vmem:[#allocation2 + $0x78] sm:$0xff]
  %v2532 = vadd.f32 %v2516, %v2500
  %v2533 = vadd.f32 %v2517, %v2501
  %v2534 = vadd.f32 %v2518, %v2502
  %v2535 = vadd.f32 %v2519, %v2503
  %v2536 = vadd.f32 %v2520, %v2504
  %v2537 = vadd.f32 %v2521, %v2505
  %v2538 = vadd.f32 %v2522, %v2506
  %v2539 = vadd.f32 %v2523, %v2507
  %v2540 = vadd.f32 %v2524, %v2508
  %v2541 = vadd.f32 %v2525, %v2509
  %v2542 = vadd.f32 %v2526, %v2510
  %v2543 = vadd.f32 %v2527, %v2511
  %v2544 = vadd.f32 %v2528, %v2512
  %v2545 = vadd.f32 %v2529, %v2513
  %v2546 = vadd.f32 %v2530, %v2514
  %v2547 = vadd.f32 %v2531, %v2515
  %2548 = vst [vmem:[#allocation2] sm:$0xff] %v2532
  %2549 = vst [vmem:[#allocation2 + $0x8] sm:$0xff] %v2533
  %2550 = vst [vmem:[#allocation2 + $0x10] sm:$0xff] %v2534
  %2551 = vst [vmem:[#allocation2 + $0x18] sm:$0xff] %v2535
  %2552 = vst [vmem:[#allocation2 + $0x20] sm:$0xff] %v2536
  %2553 = vst [vmem:[#allocation2 + $0x28] sm:$0xff] %v2537
  %2554 = vst [vmem:[#allocation2 + $0x30] sm:$0xff] %v2538
  %2555 = vst [vmem:[#allocation2 + $0x38] sm:$0xff] %v2539
  %2556 = vst [vmem:[#allocation2 + $0x40] sm:$0xff] %v2540
  %2557 = vst [vmem:[#allocation2 + $0x48] sm:$0xff] %v2541
  %2558 = vst [vmem:[#allocation2 + $0x50] sm:$0xff] %v2542
  %2559 = vst [vmem:[#allocation2 + $0x58] sm:$0xff] %v2543
  %2560 = vst [vmem:[#allocation2 + $0x60] sm:$0xff] %v2544
  %2561 = vst [vmem:[#allocation2 + $0x68] sm:$0xff] %v2545
  %2562 = vst [vmem:[#allocation2 + $0x70] sm:$0xff] %v2546
  %2563 = vst [vmem:[#allocation2 + $0x78] sm:$0xff] %v2547
  %v2564 = vld [vmem:[#allocation2] sm:$0xff]
  %v2565 = vld [vmem:[#allocation2 + $0x8] sm:$0xff]
  %v2566 = vld [vmem:[#allocation2 + $0x10] sm:$0xff]
  %v2567 = vld [vmem:[#allocation2 + $0x18] sm:$0xff]
  %v2568 = vld [vmem:[#allocation2 + $0x20] sm:$0xff]
  %v2569 = vld [vmem:[#allocation2 + $0x28] sm:$0xff]
  %v2570 = vld [vmem:[#allocation2 + $0x30] sm:$0xff]
  %v2571 = vld [vmem:[#allocation2 + $0x38] sm:$0xff]
  %v2572 = vld [vmem:[#allocation2 + $0x40] sm:$0xff]
  %v2573 = vld [vmem:[#allocation2 + $0x48] sm:$0xff]
  %v2574 = vld [vmem:[#allocation2 + $0x50] sm:$0xff]
  %v2575 = vld [vmem:[#allocation2 + $0x58] sm:$0xff]
  %v2576 = vld [vmem:[#allocation2 + $0x60] sm:$0xff]
  %v2577 = vld [vmem:[#allocation2 + $0x68] sm:$0xff]
  %v2578 = vld [vmem:[#allocation2 + $0x70] sm:$0xff]
  %v2579 = vld [vmem:[#allocation2 + $0x78] sm:$0xff]
  %v2580 = vmul.f32 %v2564, 0.125
  %v2581 = vmul.f32 %v2565, 0.125
  %v2582 = vmul.f32 %v2566, 0.125
  %v2583 = vmul.f32 %v2567, 0.125
  %v2584 = vmul.f32 %v2568, 0.125
  %v2585 = vmul.f32 %v2569, 0.125
  %v2586 = vmul.f32 %v2570, 0.125
  %v2587 = vmul.f32 %v2571, 0.125
  %v2588 = vmul.f32 %v2572, 0.125
  %v2589 = vmul.f32 %v2573, 0.125
  %v2590 = vmul.f32 %v2574, 0.125
  %v2591 = vmul.f32 %v2575, 0.125
  %v2592 = vmul.f32 %v2576, 0.125
  %v2593 = vmul.f32 %v2577, 0.125
  %v2594 = vmul.f32 %v2578, 0.125
  %v2595 = vmul.f32 %v2579, 0.125
  %v2596 = vld [vmem:[%s3] sm:$0xff]
  %v2597 = vld [vmem:[%s3 + $0x8] sm:$0xff]
  %v2598 = vld [vmem:[%s3 + $0x10] sm:$0xff]
  %v2599 = vld [vmem:[%s3 + $0x18] sm:$0xff]
  %v2600 = vld [vmem:[%s3 + $0x20] sm:$0xff]
  %v2601 = vld [vmem:[%s3 + $0x28] sm:$0xff]
  %v2602 = vld [vmem:[%s3 + $0x30] sm:$0xff]
  %v2603 = vld [vmem:[%s3 + $0x38] sm:$0xff]
  %v2604 = vld [vmem:[%s3 + $0x40] sm:$0xff]
  %v2605 = vld [vmem:[%s3 + $0x48] sm:$0xff]
  %v2606 = vld [vmem:[%s3 + $0x50] sm:$0xff]
  %v2607 = vld [vmem:[%s3 + $0x58] sm:$0xff]
  %v2608 = vld [vmem:[%s3 + $0x60] sm:$0xff]
  %v2609 = vld [vmem:[%s3 + $0x68] sm:$0xff]
  %v2610 = vld [vmem:[%s3 + $0x70] sm:$0xff]
  %v2611 = vld [vmem:[%s3 + $0x78] sm:$0xff]
  %v2612 = vld [vmem:[%s4] sm:$0xff]
  %v2613 = vld [vmem:[%s4 + $0x8] sm:$0xff]
  %v2614 = vld [vmem:[%s4 + $0x10] sm:$0xff]
  %v2615 = vld [vmem:[%s4 + $0x18] sm:$0xff]
  %v2616 = vld [vmem:[%s4 + $0x20] sm:$0xff]
  %v2617 = vld [vmem:[%s4 + $0x28] sm:$0xff]
  %v2618 = vld [vmem:[%s4 + $0x30] sm:$0xff]
  %v2619 = vld [vmem:[%s4 + $0x38] sm:$0xff]
  %v2620 = vld [vmem:[%s4 + $0x40] sm:$0xff]
  %v2621 = vld [vmem:[%s4 + $0x48] sm:$0xff]
  %v2622 = vld [vmem:[%s4 + $0x50] sm:$0xff]
  %v2623 = vld [vmem:[%s4 + $0x58] sm:$0xff]
  %v2624 = vld [vmem:[%s4 + $0x60] sm:$0xff]
  %v2625 = vld [vmem:[%s4 + $0x68] sm:$0xff]
  %v2626 = vld [vmem:[%s4 + $0x70] sm:$0xff]
  %v2627 = vld [vmem:[%s4 + $0x78] sm:$0xff]
  %2629 = vset.pattern.permute.xlu0 0
  %2630 = vperm.xlu0 %2629, %v2612
  %v2631 = vpop.permute.xlu0 %2630
  %2634 = vset.pattern.permute.xlu0 0
  %2635 = vperm.xlu0 %2634, %v2613
  %v2636 = vpop.permute.xlu0 %2635
  %2639 = vset.pattern.permute.xlu0 0
  %2640 = vperm.xlu0 %2639, %v2614
  %v2641 = vpop.permute.xlu0 %2640
  %2644 = vset.pattern.permute.xlu0 0
  %2645 = vperm.xlu0 %2644, %v2615
  %v2646 = vpop.permute.xlu0 %2645
  %2649 = vset.pattern.permute.xlu0 0
  %2650 = vperm.xlu0 %2649, %v2616
  %v2651 = vpop.permute.xlu0 %2650
  %2654 = vset.pattern.permute.xlu0 0
  %2655 = vperm.xlu0 %2654, %v2617
  %v2656 = vpop.permute.xlu0 %2655
  %2659 = vset.pattern.permute.xlu0 0
  %2660 = vperm.xlu0 %2659, %v2618
  %v2661 = vpop.permute.xlu0 %2660
  %2664 = vset.pattern.permute.xlu0 0
  %2665 = vperm.xlu0 %2664, %v2619
  %v2666 = vpop.permute.xlu0 %2665
  %2669 = vset.pattern.permute.xlu0 0
  %2670 = vperm.xlu0 %2669, %v2620
  %v2671 = vpop.permute.xlu0 %2670
  %2674 = vset.pattern.permute.xlu0 0
  %2675 = vperm.xlu0 %2674, %v2621
  %v2676 = vpop.permute.xlu0 %2675
  %2679 = vset.pattern.permute.xlu0 0
  %2680 = vperm.xlu0 %2679, %v2622
  %v2681 = vpop.permute.xlu0 %2680
  %2684 = vset.pattern.permute.xlu0 0
  %2685 = vperm.xlu0 %2684, %v2623
  %v2686 = vpop.permute.xlu0 %2685
  %2689 = vset.pattern.permute.xlu0 0
  %2690 = vperm.xlu0 %2689, %v2624
  %v2691 = vpop.permute.xlu0 %2690
  %2694 = vset.pattern.permute.xlu0 0
  %2695 = vperm.xlu0 %2694, %v2625
  %v2696 = vpop.permute.xlu0 %2695
  %2699 = vset.pattern.permute.xlu0 0
  %2700 = vperm.xlu0 %2699, %v2626
  %v2701 = vpop.permute.xlu0 %2700
  %2704 = vset.pattern.permute.xlu0 0
  %2705 = vperm.xlu0 %2704, %v2627
  %v2706 = vpop.permute.xlu0 %2705
  %2708 = vmatprep.subr.mxu0 0.0
  %2709 = vmatpush1.msra.mxu0 %v2595
  %2710 = vmatprep.subr.mxu0 0.0
  %2711 = vmatpush1.msra.mxu0 %v2594
  %2712 = vmatprep.subr.mxu0 0.0
  %2713 = vmatpush1.msra.mxu0 %v2593
  %2714 = vmatprep.subr.mxu0 0.0
  %2715 = vmatpush1.msra.mxu0 %v2592
  %2716 = vmatprep.subr.mxu0 0.0
  %2717 = vmatpush1.msra.mxu0 %v2591
  %2718 = vmatprep.subr.mxu0 0.0
  %2719 = vmatpush1.msra.mxu0 %v2590
  %2720 = vmatprep.subr.mxu0 0.0
  %2721 = vmatpush1.msra.mxu0 %v2589
  %2722 = vmatprep.subr.mxu0 0.0
  %2723 = vmatpush1.msra.mxu0 %v2588
  %2724 = vmatprep.subr.mxu0 0.0
  %2725 = vmatpush1.msra.mxu0 %v2587
  %2726 = vmatprep.subr.mxu0 0.0
  %2727 = vmatpush1.msra.mxu0 %v2586
  %2728 = vmatprep.subr.mxu0 0.0
  %2729 = vmatpush1.msra.mxu0 %v2585
  %2730 = vmatprep.subr.mxu0 0.0
  %2731 = vmatpush1.msra.mxu0 %v2584
  %2732 = vmatprep.subr.mxu0 0.0
  %2733 = vmatpush1.msra.mxu0 %v2583
  %2734 = vmatprep.subr.mxu0 0.0
  %2735 = vmatpush1.msra.mxu0 %v2582
  %2736 = vmatprep.subr.mxu0 0.0
  %2737 = vmatpush1.msra.mxu0 %v2581
  %2738 = vmatprep.subr.mxu0 0.0
  %2739 = vmatpush1.msra.mxu0 %v2580
  %2740 = vmatprep.subr.mxu0 0.0
  %2741 = vmatpush2.msra.mxu0 0.0
  %2742 = vmatprep.subr.mxu0 0.0
  %2743 = vmatpush2.msra.mxu0 0.0
  %2744 = vmatprep.subr.mxu0 0.0
  %2745 = vmatpush2.msra.mxu0 0.0
  %2746 = vmatprep.subr.mxu0 0.0
  %2747 = vmatpush2.msra.mxu0 0.0
  %2748 = vmatprep.subr.mxu0 0.0
  %2749 = vmatpush2.msra.mxu0 0.0
  %2750 = vmatprep.subr.mxu0 0.0
  %2751 = vmatpush2.msra.mxu0 0.0
  %2752 = vmatprep.subr.mxu0 0.0
  %2753 = vmatpush2.msra.mxu0 0.0
  %2754 = vmatprep.subr.mxu0 0.0
  %2755 = vmatpush2.msra.mxu0 0.0
  %2756 = vmatprep.subr.mxu0 0.0
  %2757 = vmatpush2.msra.mxu0 0.0
  %2758 = vmatprep.subr.mxu0 0.0
  %2759 = vmatpush2.msra.mxu0 0.0
  %2760 = vmatprep.subr.mxu0 0.0
  %2761 = vmatpush2.msra.mxu0 0.0
  %2762 = vmatprep.subr.mxu0 0.0
  %2763 = vmatpush2.msra.mxu0 0.0
  %2764 = vmatprep.subr.mxu0 0.0
  %2765 = vmatpush2.msra.mxu0 0.0
  %2766 = vmatprep.subr.mxu0 0.0
  %2767 = vmatpush2.msra.mxu0 0.0
  %2768 = vmatprep.subr.mxu0 0.0
  %2769 = vmatpush2.msra.mxu0 0.0
  %2770 = vmatprep.subr.mxu0 0.0
  %2771 = vmatpush2.msra.mxu0 0.0
  %2772 = vmatprep.mubr.f32.mxu0 0.0
  %2773 = vmatmul.mubr.f32.gmra.mxu0 %v2596
  %v2774 = vpop.f32.mrf.mxu0
  %v2775 = vadd.f32 %v2631, %v2774
  %v2776 = vpop.f32.mrf.mxu0
  %2777 = vmatprep.mubr.f32.mxu0 0.0
  %2778 = vmatmul.mubr.f32.gmra.mxu0 %v2597
  %v2779 = vpop.f32.mrf.mxu0
  %v2780 = vadd.f32 %v2636, %v2779
  %v2781 = vpop.f32.mrf.mxu0
  %2782 = vmatprep.mubr.f32.mxu0 0.0
  %2783 = vmatmul.mubr.f32.gmra.mxu0 %v2598
  %v2784 = vpop.f32.mrf.mxu0
  %v2785 = vadd.f32 %v2641, %v2784
  %v2786 = vpop.f32.mrf.mxu0
  %2787 = vmatprep.mubr.f32.mxu0 0.0
  %2788 = vmatmul.mubr.f32.gmra.mxu0 %v2599
  %v2789 = vpop.f32.mrf.mxu0
  %v2790 = vadd.f32 %v2646, %v2789
  %v2791 = vpop.f32.mrf.mxu0
  %2792 = vmatprep.mubr.f32.mxu0 0.0
  %2793 = vmatmul.mubr.f32.gmra.mxu0 %v2600
  %v2794 = vpop.f32.mrf.mxu0
  %v2795 = vadd.f32 %v2651, %v2794
  %v2796 = vpop.f32.mrf.mxu0
  %2797 = vmatprep.mubr.f32.mxu0 0.0
  %2798 = vmatmul.mubr.f32.gmra.mxu0 %v2601
  %v2799 = vpop.f32.mrf.mxu0
  %v2800 = vadd.f32 %v2656, %v2799
  %v2801 = vpop.f32.mrf.mxu0
  %2802 = vmatprep.mubr.f32.mxu0 0.0
  %2803 = vmatmul.mubr.f32.gmra.mxu0 %v2602
  %v2804 = vpop.f32.mrf.mxu0
  %v2805 = vadd.f32 %v2661, %v2804
  %v2806 = vpop.f32.mrf.mxu0
  %2807 = vmatprep.mubr.f32.mxu0 0.0
  %2808 = vmatmul.mubr.f32.gmra.mxu0 %v2603
  %v2809 = vpop.f32.mrf.mxu0
  %v2810 = vadd.f32 %v2666, %v2809
  %v2811 = vpop.f32.mrf.mxu0
  %2812 = vmatprep.mubr.f32.mxu0 0.0
  %2813 = vmatmul.mubr.f32.gmra.mxu0 %v2604
  %v2814 = vpop.f32.mrf.mxu0
  %v2815 = vadd.f32 %v2671, %v2814
  %v2816 = vpop.f32.mrf.mxu0
  %2817 = vmatprep.mubr.f32.mxu0 0.0
  %2818 = vmatmul.mubr.f32.gmra.mxu0 %v2605
  %v2819 = vpop.f32.mrf.mxu0
  %v2820 = vadd.f32 %v2676, %v2819
  %v2821 = vpop.f32.mrf.mxu0
  %2822 = vmatprep.mubr.f32.mxu0 0.0
  %2823 = vmatmul.mubr.f32.gmra.mxu0 %v2606
  %v2824 = vpop.f32.mrf.mxu0
  %v2825 = vadd.f32 %v2681, %v2824
  %v2826 = vpop.f32.mrf.mxu0
  %2827 = vmatprep.mubr.f32.mxu0 0.0
  %2828 = vmatmul.mubr.f32.gmra.mxu0 %v2607
  %v2829 = vpop.f32.mrf.mxu0
  %v2830 = vadd.f32 %v2686, %v2829
  %v2831 = vpop.f32.mrf.mxu0
  %2832 = vmatprep.mubr.f32.mxu0 0.0
  %2833 = vmatmul.mubr.f32.gmra.mxu0 %v2608
  %v2834 = vpop.f32.mrf.mxu0
  %v2835 = vadd.f32 %v2691, %v2834
  %v2836 = vpop.f32.mrf.mxu0
  %2837 = vmatprep.mubr.f32.mxu0 0.0
  %2838 = vmatmul.mubr.f32.gmra.mxu0 %v2609
  %v2839 = vpop.f32.mrf.mxu0
  %v2840 = vadd.f32 %v2696, %v2839
  %v2841 = vpop.f32.mrf.mxu0
  %2842 = vmatprep.mubr.f32.mxu0 0.0
  %2843 = vmatmul.mubr.f32.gmra.mxu0 %v2610
  %v2844 = vpop.f32.mrf.mxu0
  %v2845 = vadd.f32 %v2701, %v2844
  %v2846 = vpop.f32.mrf.mxu0
  %2847 = vmatprep.mubr.f32.mxu0 0.0
  %2848 = vmatmul.mubr.f32.gmra.mxu0 %v2611
  %v2849 = vpop.f32.mrf.mxu0
  %v2850 = vadd.f32 %v2706, %v2849
  %v2851 = vpop.f32.mrf.mxu0
  %2852 = vdwg.mxu0
  %v2853 = vmax.f32 %v2775, 0.0
  %v2854 = vmax.f32 %v2780, 0.0
  %v2855 = vmax.f32 %v2785, 0.0
  %v2856 = vmax.f32 %v2790, 0.0
  %v2857 = vmax.f32 %v2795, 0.0
  %v2858 = vmax.f32 %v2800, 0.0
  %v2859 = vmax.f32 %v2805, 0.0
  %v2860 = vmax.f32 %v2810, 0.0
  %v2861 = vmax.f32 %v2815, 0.0
  %v2862 = vmax.f32 %v2820, 0.0
  %v2863 = vmax.f32 %v2825, 0.0
  %v2864 = vmax.f32 %v2830, 0.0
  %v2865 = vmax.f32 %v2835, 0.0
  %v2866 = vmax.f32 %v2840, 0.0
  %v2867 = vmax.f32 %v2845, 0.0
  %v2868 = vmax.f32 %v2850, 0.0
  %v2869 = vld [vmem:[%s5] sm:$0xff]
  %v2870 = vld [vmem:[%s5 + $0x8] sm:$0xff]
  %v2871 = vld [vmem:[%s5 + $0x10] sm:$0xff]
  %v2872 = vld [vmem:[%s5 + $0x18] sm:$0xff]
  %v2873 = vld [vmem:[%s5 + $0x20] sm:$0xff]
  %v2874 = vld [vmem:[%s5 + $0x28] sm:$0xff]
  %v2875 = vld [vmem:[%s5 + $0x30] sm:$0xff]
  %v2876 = vld [vmem:[%s5 + $0x38] sm:$0xff]
  %v2877 = vld [vmem:[%s5 + $0x40] sm:$0xff]
  %v2878 = vld [vmem:[%s5 + $0x48] sm:$0xff]
  %v2879 = vld [vmem:[%s5 + $0x50] sm:$0xff]
  %v2880 = vld [vmem:[%s5 + $0x58] sm:$0xff]
  %v2881 = vld [vmem:[%s5 + $0x60] sm:$0xff]
  %v2882 = vld [vmem:[%s5 + $0x68] sm:$0xff]
  %v2883 = vld [vmem:[%s5 + $0x70] sm:$0xff]
  %v2884 = vld [vmem:[%s5 + $0x78] sm:$0xff]
  %2886 = vset.pattern.permute.xlu0 0
  %2887 = vperm.xlu0 %2886, %v2869
  %v2888 = vpop.permute.xlu0 %2887
  %2891 = vset.pattern.permute.xlu0 0
  %2892 = vperm.xlu0 %2891, %v2870
  %v2893 = vpop.permute.xlu0 %2892
  %2896 = vset.pattern.permute.xlu0 0
  %2897 = vperm.xlu0 %2896, %v2871
  %v2898 = vpop.permute.xlu0 %2897
  %2901 = vset.pattern.permute.xlu0 0
  %2902 = vperm.xlu0 %2901, %v2872
  %v2903 = vpop.permute.xlu0 %2902
  %2906 = vset.pattern.permute.xlu0 0
  %2907 = vperm.xlu0 %2906, %v2873
  %v2908 = vpop.permute.xlu0 %2907
  %2911 = vset.pattern.permute.xlu0 0
  %2912 = vperm.xlu0 %2911, %v2874
  %v2913 = vpop.permute.xlu0 %2912
  %2916 = vset.pattern.permute.xlu0 0
  %2917 = vperm.xlu0 %2916, %v2875
  %v2918 = vpop.permute.xlu0 %2917
  %2921 = vset.pattern.permute.xlu0 0
  %2922 = vperm.xlu0 %2921, %v2876
  %v2923 = vpop.permute.xlu0 %2922
  %2926 = vset.pattern.permute.xlu0 0
  %2927 = vperm.xlu0 %2926, %v2877
  %v2928 = vpop.permute.xlu0 %2927
  %2931 = vset.pattern.permute.xlu0 0
  %2932 = vperm.xlu0 %2931, %v2878
  %v2933 = vpop.permute.xlu0 %2932
  %2936 = vset.pattern.permute.xlu0 0
  %2937 = vperm.xlu0 %2936, %v2879
  %v2938 = vpop.permute.xlu0 %2937
  %2941 = vset.pattern.permute.xlu0 0
  %2942 = vperm.xlu0 %2941, %v2880
  %v2943 = vpop.permute.xlu0 %2942
  %2946 = vset.pattern.permute.xlu0 0
  %2947 = vperm.xlu0 %2946, %v2881
  %v2948 = vpop.permute.xlu0 %2947
  %2951 = vset.pattern.permute.xlu0 0
  %2952 = vperm.xlu0 %2951, %v2882
  %v2953 = vpop.permute.xlu0 %2952
  %2956 = vset.pattern.permute.xlu0 0
  %2957 = vperm.xlu0 %2956, %v2883
  %v2958 = vpop.permute.xlu0 %2957
  %2961 = vset.pattern.permute.xlu0 0
  %2962 = vperm.xlu0 %2961, %v2884
  %v2963 = vpop.permute.xlu0 %2962
  %v2965 = vmul.f32 %v2853, %v2888
  %v2966 = vmul.f32 %v2854, %v2893
  %v2967 = vmul.f32 %v2855, %v2898
  %v2968 = vmul.f32 %v2856, %v2903
  %v2969 = vmul.f32 %v2857, %v2908
  %v2970 = vmul.f32 %v2858, %v2913
  %v2971 = vmul.f32 %v2859, %v2918
  %v2972 = vmul.f32 %v2860, %v2923
  %v2973 = vmul.f32 %v2861, %v2928
  %v2974 = vmul.f32 %v2862, %v2933
  %v2975 = vmul.f32 %v2863, %v2938
  %v2976 = vmul.f32 %v2864, %v2943
  %v2977 = vmul.f32 %v2865, %v2948
  %v2978 = vmul.f32 %v2866, %v2953
  %v2979 = vmul.f32 %v2867, %v2958
  %v2980 = vmul.f32 %v2868, %v2963
  %v2981 = vadd.f32 %v2965, %v2966
  %v2982 = vadd.f32 %v2981, %v2967
  %v2983 = vadd.f32 %v2982, %v2968
  %v2984 = vadd.f32 %v2983, %v2969
  %v2985 = vadd.f32 %v2984, %v2970
  %v2986 = vadd.f32 %v2985, %v2971
  %v2987 = vadd.f32 %v2986, %v2972
  %v2988 = vadd.f32 %v2987, %v2973
  %v2989 = vadd.f32 %v2988, %v2974
  %v2990 = vadd.f32 %v2989, %v2975
  %v2991 = vadd.f32 %v2990, %v2976
  %v2992 = vadd.f32 %v2991, %v2977
  %v2993 = vadd.f32 %v2992, %v2978
  %v2994 = vadd.f32 %v2993, %v2979
  %v2995 = vadd.f32 %v2994, %v2980
  %v2996 = vrot.slane %v2995, 4
  %v2997 = vadd.f32 %v2995, %v2996
  %v2998 = vrot.slane %v2997, 2
  %v2999 = vadd.f32 %v2997, %v2998
  %v3000 = vrot.slane %v2999, 1
  %v3001 = vadd.f32 %v2999, %v3000
  %s3002 = sld [smem:[#allocation3]]
  %v3003 = vstv %s3002
  %v3004 = vadd.f32 %v3001, %v3003
  %v3005 = vxor.u32 %v3004, 2147483648
  %v3006 = vmul.f32 %v3005, 1.442695
  %v3007 = vpow.pop %v3006
  %v3008 = vadd.f32 %v3007, 1.0
  %v3009 = vrcp.pop %v3008
  %v3010 = vmul.f32 1.0, %v3009
  %3011 = vst [vmem:[%s7] sm:$0x1] %v3010
  // Predicated region
  $region30: #{jet_classifier_forward.1} parent=0 // pred_check
    _
  $region31: #{jet_classifier_forward.1} parent=0 // pred_check_branch
    %3013 = sbr.rel (0) target = $region33
  $region32: #{jet_classifier_forward.1} parent=0 // pred_region
    _
  $region33: #{jet_classifier_forward.1} parent=0 // pred_fallthru
    _
  // Predicated region
  $region34: #{jet_classifier_forward.1} parent=0 // pred_check
    _
  $region35: #{jet_classifier_forward.1} parent=0 // pred_check_branch
    %3015 = sbr.rel (0) target = $region37
  $region36: #{jet_classifier_forward.1} parent=0 // pred_region
    _
  $region37: #{jet_classifier_forward.1} parent=0 // pred_fallthru
    _

</llo_original>
